<compile_context>
chip_gen: v6e
topology: v6e:2x2x1
jax: 0.10.0
libtpu: 0.0.40
codegen_flags: <defaults>
</compile_context>

<pallas_src>
import functools

import jax
import jax.numpy as jnp
from jax.experimental import pallas as pl
from jax.experimental.pallas import tpu as pltpu


def _round_up(n, m):
    return ((n + m - 1) // m) * m


def _rnn_attention_kernel(x_ref, wih_ref, whh_ref, b_ref, watt_ref,
                          wd_ref, bd_ref, o_ref, pre_ref, hseq_ref):
    S, TB, _ = x_ref.shape
    Hp = wih_ref.shape[1]
    f32 = jnp.float32

    # ---- 1. Hoisted input projection: one big-M matmul, off the serial chain.
    #      x_ref is time-major (S, TB, I); merging the leading dims is a
    #      layout-preserving reshape (TB is a multiple of the sublane tile).
    x2d = x_ref[...].reshape(S * TB, x_ref.shape[2])
    pre_ref[...] = (jnp.dot(x2d, wih_ref[...], preferred_element_type=f32)
                    + b_ref[...])                       # (S*TB, Hp) f32

    # ---- 2. Serial tanh recurrence: per-step critical path = one MXU op + tanh.
    whh = whh_ref[...]                                  # (Hp, Hp) f32
    h = jnp.tanh(pre_ref[pl.ds(0, TB), :])              # h0 == 0
    hseq_ref[:, pl.ds(0, Hp)] = h.astype(hseq_ref.dtype)
    for t in range(1, S):
        h = jnp.tanh(pre_ref[pl.ds(t * TB, TB), :]
                     + jnp.dot(h, whh, preferred_element_type=f32))
        hseq_ref[:, pl.ds(t * Hp, Hp)] = h.astype(hseq_ref.dtype)

    # ---- 3. Attention logits: one matmul against the block-diagonal att
    #      weight, then softmax over time. (att_fc bias is a per-row constant
    #      shift -> exact no-op under softmax; dropped.)
    logits = jnp.dot(hseq_ref[...], watt_ref[...],
                     preferred_element_type=f32)        # (TB, S)
    logits = logits - jnp.max(logits, axis=-1, keepdims=True)
    e = jnp.exp(logits)
    attn = e / jnp.sum(e, axis=-1, keepdims=True)       # (TB, S)

    # ---- 4. Scale each time-slice of the staged hidden states by its
    #      attention weight (in VMEM), then ONE large-K matmul for the
    #      'concate' dense layer.
    for t in range(S):
        sl = pl.ds(t * Hp, Hp)
        hseq_ref[:, sl] = (hseq_ref[:, sl].astype(f32)
                           * attn[:, t:t + 1]).astype(hseq_ref.dtype)
    out = jnp.dot(hseq_ref[...], wd_ref[...], preferred_element_type=f32)
    o_ref[...] = (out + bd_ref[...]).astype(o_ref.dtype)


def rnn_attention_forward(x, weight_ih, weight_hh, bias_ih, bias_hh,
                          att_w, att_b, dense_w, dense_b, *,
                          block_batch=None, use_bf16=True):
    """Fused RNN_Attention forward (cell='RNN', layerNum=1, merge='concate').

    Raw PyTorch layouts:
      x         [B, S, inputDim]
      weight_ih [H, inputDim], weight_hh [H, H], bias_ih/bias_hh [H]
      att_w     [1, H], att_b [1]        (att_fc)
      dense_w   [O, S*H], dense_b [O]    (dense, merge='concate')
    Returns [B, O].
    """
    # TODO(synk): num_layers > 1 stacked RNN and the merge='mean' branch are not
    # implemented; this matches the module defaults (layerNum=1, merge='concate').
    del att_b  # scalar shift of all logits before softmax -> exact no-op.

    B, S, I = x.shape
    H = weight_hh.shape[0]
    O = dense_w.shape[0]
    assert dense_w.shape[1] == S * H

    LANE = 128
    Hp = _round_up(H, LANE)
    # Batch tile: multiple of 16 (bf16 sublane tile). Tune per generation:
    # v6e can afford TB=256; on v7x prefer TB such that grid = Bp/TB >= 2 so
    # both TensorCores engage.
    TB = block_batch or (128 if B >= 128 else _round_up(B, 16))
    assert TB % 16 == 0, "block_batch must be a multiple of 16"
    Bp = _round_up(B, TB)

    f32 = jnp.float32
    cdt = jnp.bfloat16 if use_bf16 else jnp.float32   # non-recurrent operands

    # Time-major activations: kernel reads a contiguous (TB, I) slab per step
    # and can do the hoisted projection as one contiguous (S*TB, I) matmul.
    # (inputDim is typically tiny for this model, so this extra pass over x is
    # negligible next to the serial recurrence.)
    x_p = jnp.zeros((S, Bp, I), cdt).at[:, :B, :].set(
        jnp.transpose(x, (1, 0, 2)).astype(cdt))

    # Zero-pad H to a lane multiple. Padded hidden units stay exactly zero
    # through the recurrence (their W_ih/W_hh columns and bias are zero) and
    # contribute nothing to the attention logits or the dense output.
    w_ih = jnp.zeros((I, Hp), cdt).at[:, :H].set(weight_ih.T.astype(cdt))
    w_hh = jnp.zeros((Hp, Hp), f32).at[:H, :H].set(weight_hh.astype(f32).T)
    b = jnp.zeros((1, Hp), f32).at[0, :H].set(
        bias_ih.astype(f32) + bias_hh.astype(f32))

    # Block-diagonal att_fc weight: (S*Hp, S), column t holds att_w in rows
    # [t*Hp, t*Hp+H). One matmul then yields all per-step logits at once.
    watt = jnp.zeros((Hp,), f32).at[:H].set(att_w.astype(f32).reshape(H))
    watt_bd = (jnp.eye(S, dtype=f32)[:, None, :]
               * watt[None, :, None]).reshape(S * Hp, S).astype(cdt)

    # Dense weight laid out to match the (TB, S*Hp) staged-hidden layout.
    # O is kept un-padded (full-last-dim block is legal; padding to 128 would
    # inflate this weight massively for small O).
    w_d = jnp.zeros((S, Hp, O), f32).at[:, :H, :].set(
        dense_w.astype(f32).T.reshape(S, H, O))
    w_d = w_d.reshape(S * Hp, O).astype(cdt)
    b_d = dense_b.astype(f32).reshape(1, O)

    grid = (Bp // TB,)
    bpe = 2 if use_bf16 else 4
    cost = pl.CostEstimate(
        flops=int(2 * Bp * S * Hp * (I + Hp + S + O)),
        transcendentals=int(Bp * S * (Hp + 1)),
        bytes_accessed=int(bpe * (x_p.size + w_ih.size + watt_bd.size + w_d.size)
                           + 4 * (w_hh.size + b.size + b_d.size + Bp * O)),
    )

    out = pl.pallas_call(
        _rnn_attention_kernel,
        out_shape=jax.ShapeDtypeStruct((Bp, O), f32),
        grid=grid,
        in_specs=[
            pl.BlockSpec((S, TB, I), lambda i: (0, i, 0)),     # x (time-major)
            pl.BlockSpec((I, Hp), lambda i: (0, 0)),           # W_ih^T
            pl.BlockSpec((Hp, Hp), lambda i: (0, 0)),          # W_hh^T (f32)
            pl.BlockSpec((1, Hp), lambda i: (0, 0)),           # b_ih + b_hh
            pl.BlockSpec((S * Hp, S), lambda i: (0, 0)),       # block-diag att W
            pl.BlockSpec((S * Hp, O), lambda i: (0, 0)),       # dense weight
            pl.BlockSpec((1, O), lambda i: (0, 0)),            # dense bias
        ],
        out_specs=pl.BlockSpec((TB, O), lambda i: (i, 0)),
        scratch_shapes=[
            pltpu.VMEM((S * TB, Hp), f32),   # hoisted pre-activations
            pltpu.VMEM((TB, S * Hp), cdt),   # staged hidden states (lane-concat)
        ],
        compiler_params=pltpu.CompilerParams(
            dimension_semantics=("parallel",),   # batch tiles -> 2 TCs on v7x
            vmem_limit_bytes=32 * 1024 * 1024,
        ),
        cost_estimate=cost,
    )(x_p, w_ih, w_hh, b, watt_bd, w_d, b_d)

    return out[:B, :O]


def rnn_attention_reference(x, weight_ih, weight_hh, bias_ih, bias_hh,
                            att_w, att_b, dense_w, dense_b):
    """Pure-JAX reference (same math as the PyTorch forward)."""
    B, S, _ = x.shape
    H = weight_hh.shape[0]
    h = jnp.zeros((B, H), jnp.float32)
    outs = []
    for t in range(S):
        h = jnp.tanh(x[:, t, :] @ weight_ih.T + h @ weight_hh.T
                     + bias_ih + bias_hh)
        outs.append(h)
    rnn = jnp.stack(outs, axis=1)                               # (B, S, H)
    logits = (rnn @ att_w.reshape(H, 1)).reshape(B, S) + att_b[0]
    attn = jax.nn.softmax(logits, axis=-1)                      # F.softmax dim=1
    weighted = rnn * attn[:, :, None]
    return weighted.reshape(B, S * H) @ dense_w.T + dense_b


if __name__ == "__main__":
    # Small shapes consistent with RNN_Attention(inputDim, hiddenNum, outputDim,
    # layerNum=1, seq_len, cell='RNN', merge='concate').
    batch, seq_len, input_dim, hidden, out_dim = 4, 8, 16, 32, 8

    key = jax.random.PRNGKey(0)
    ks = jax.random.split(key, 9)
    x = jax.random.normal(ks[0], (batch, seq_len, input_dim), jnp.float32)

    lim = 1.0 / jnp.sqrt(hidden)                  # nn.RNN / nn.Linear style init
    weight_ih = jax.random.uniform(ks[1], (hidden, input_dim), jnp.float32, -lim, lim)
    weight_hh = jax.random.uniform(ks[2], (hidden, hidden), jnp.float32, -lim, lim)
    bias_ih = jax.random.uniform(ks[3], (hidden,), jnp.float32, -lim, lim)
    bias_hh = jax.random.uniform(ks[4], (hidden,), jnp.float32, -lim, lim)
    att_w = jax.random.uniform(ks[5], (1, hidden), jnp.float32, -lim, lim)
    att_b = jax.random.uniform(ks[6], (1,), jnp.float32, -lim, lim)
    lim_d = 1.0 / jnp.sqrt(hidden * seq_len)
    dense_w = jax.random.uniform(ks[7], (out_dim, hidden * seq_len), jnp.float32,
                                 -lim_d, lim_d)
    dense_b = jax.random.uniform(ks[8], (out_dim,), jnp.float32, -lim_d, lim_d)

    out = rnn_attention_forward(x, weight_ih, weight_hh, bias_ih, bias_hh,
                                att_w, att_b, dense_w, dense_b, use_bf16=True)
    jax.block_until_ready(out)

    with jax.default_matmul_precision("highest"):
        ref = rnn_attention_reference(x, weight_ih, weight_hh, bias_ih, bias_hh,
                                      att_w, att_b, dense_w, dense_b)
        ref = jax.block_until_ready(ref)

    assert out.shape == (batch, out_dim)
    # Tolerance accounts for bf16 operands on the non-recurrent matmul paths
    # (recurrence itself accumulates in f32).
    assert jnp.allclose(out, ref, atol=1e-2, rtol=1e-2), float(jnp.max(jnp.abs(out - ref)))

    print("KERNEL_OK")
</pallas_src>

<mosaic_0001>
module attributes {stable_mosaic.version = 11 : i64} {
  func.func @_rnn_attention_kernel(%arg0: i32, %arg1: memref<8x16x16xbf16, #tpu.memory_space<vmem>>, %arg2: memref<16x128xbf16, #tpu.memory_space<vmem>>, %arg3: memref<128x128xf32, #tpu.memory_space<vmem>>, %arg4: memref<1x128xf32, #tpu.memory_space<vmem>>, %arg5: memref<1024x8xbf16, #tpu.memory_space<vmem>>, %arg6: memref<1024x8xbf16, #tpu.memory_space<vmem>>, %arg7: memref<1x8xf32, #tpu.memory_space<vmem>>, %arg8: memref<16x8xf32, #tpu.memory_space<vmem>>, %arg9: memref<128x128xf32, #tpu.memory_space<vmem>>, %arg10: memref<16x1024xbf16, #tpu.memory_space<vmem>>) attributes {dimension_semantics = [#tpu.dimension_semantics<parallel>], iteration_bounds = array<i64: 1>, scalar_prefetch = 0 : i64, scratch_operands = 2 : i64, tpu.core_type = #tpu.core_type<tc>, window_params = [{transform_indices = @transform_0, window_bounds = array<i64: 8, 16, 16>}, {pipeline_mode = #tpu.pipeline_mode<synchronous>, transform_indices = @transform_1, window_bounds = array<i64: 16, 128>}, {pipeline_mode = #tpu.pipeline_mode<synchronous>, transform_indices = @transform_2, window_bounds = array<i64: 128, 128>}, {pipeline_mode = #tpu.pipeline_mode<synchronous>, transform_indices = @transform_3, window_bounds = array<i64: 1, 128>}, {pipeline_mode = #tpu.pipeline_mode<synchronous>, transform_indices = @transform_4, window_bounds = array<i64: 1024, 8>}, {pipeline_mode = #tpu.pipeline_mode<synchronous>, transform_indices = @transform_5, window_bounds = array<i64: 1024, 8>}, {pipeline_mode = #tpu.pipeline_mode<synchronous>, transform_indices = @transform_6, window_bounds = array<i64: 1, 8>}, {transform_indices = @transform_7, window_bounds = array<i64: 16, 8>}]} {
    %c0 = arith.constant 0 : index
    %c0_0 = arith.constant 0 : index
    %c0_1 = arith.constant 0 : index
    %0 = vector.load %arg1[%c0, %c0_0, %c0_1] : memref<8x16x16xbf16, #tpu.memory_space<vmem>>, vector<8x16x16xbf16>
    %1 = vector.shape_cast %0 : vector<8x16x16xbf16> to vector<128x16xbf16>
    %c0_2 = arith.constant 0 : index
    %c0_3 = arith.constant 0 : index
    %2 = vector.load %arg2[%c0_2, %c0_3] : memref<16x128xbf16, #tpu.memory_space<vmem>>, vector<16x128xbf16>
    %cst = arith.constant dense<0.000000e+00> : vector<128x128xf32>
    %3 = tpu.matmul %1, %2, %cst {dimension_numbers = #tpu.dot_dimension_numbers<[1], [0], [0], [1], [0, 0, 1, 1], [], []>} : vector<128x16xbf16>, vector<16x128xbf16>, vector<128x128xf32> -> vector<128x128xf32>
    %c0_4 = arith.constant 0 : index
    %c0_5 = arith.constant 0 : index
    %4 = vector.load %arg4[%c0_4, %c0_5] : memref<1x128xf32, #tpu.memory_space<vmem>>, vector<1x128xf32>
    %5 = vector.broadcast %4 : vector<1x128xf32> to vector<128x128xf32>
    %6 = arith.addf %3, %5 : vector<128x128xf32>
    %c0_6 = arith.constant 0 : index
    %c0_7 = arith.constant 0 : index
    %7 = vector.load %arg9[%c0_6, %c0_7] : memref<128x128xf32, #tpu.memory_space<vmem>>, vector<128x128xf32>
    tpu.vector_store %arg9[%c0_6, %c0_7], %6 {strides = array<i32>} : memref<128x128xf32, #tpu.memory_space<vmem>>, vector<128x128xf32>,
    %c0_8 = arith.constant 0 : index
    %c0_9 = arith.constant 0 : index
    %8 = vector.load %arg3[%c0_8, %c0_9] : memref<128x128xf32, #tpu.memory_space<vmem>>, vector<128x128xf32>
    %c0_10 = arith.constant 0 : index
    %c0_11 = arith.constant 0 : index
    %9 = vector.load %arg9[%c0_10, %c0_11] : memref<128x128xf32, #tpu.memory_space<vmem>>, vector<16x128xf32>
    %10 = math.tanh %9 : vector<16x128xf32>
    %11 = arith.truncf %10 : vector<16x128xf32> to vector<16x128xbf16>
    %c0_12 = arith.constant 0 : index
    %c0_13 = arith.constant 0 : index
    %12 = vector.load %arg10[%c0_12, %c0_13] : memref<16x1024xbf16, #tpu.memory_space<vmem>>, vector<16x128xbf16>
    tpu.vector_store %arg10[%c0_12, %c0_13], %11 {strides = array<i32>} : memref<16x1024xbf16, #tpu.memory_space<vmem>>, vector<16x128xbf16>,
    %c16 = arith.constant 16 : index
    %c0_14 = arith.constant 0 : index
    %13 = vector.load %arg9[%c16, %c0_14] : memref<128x128xf32, #tpu.memory_space<vmem>>, vector<16x128xf32>
    %cst_15 = arith.constant dense<0.000000e+00> : vector<16x128xf32>
    %14 = tpu.matmul %10, %8, %cst_15 {dimension_numbers = #tpu.dot_dimension_numbers<[1], [0], [0], [1], [0, 0, 1, 1], [], []>} : vector<16x128xf32>, vector<128x128xf32>, vector<16x128xf32> -> vector<16x128xf32>
    %15 = arith.addf %13, %14 : vector<16x128xf32>
    %16 = math.tanh %15 : vector<16x128xf32>
    %17 = arith.truncf %16 : vector<16x128xf32> to vector<16x128xbf16>
    %c0_16 = arith.constant 0 : index
    %c128 = arith.constant 128 : index
    %18 = vector.load %arg10[%c0_16, %c128] : memref<16x1024xbf16, #tpu.memory_space<vmem>>, vector<16x128xbf16>
    tpu.vector_store %arg10[%c0_16, %c128], %17 {strides = array<i32>} : memref<16x1024xbf16, #tpu.memory_space<vmem>>, vector<16x128xbf16>,
    %c32 = arith.constant 32 : index
    %c0_17 = arith.constant 0 : index
    %19 = vector.load %arg9[%c32, %c0_17] : memref<128x128xf32, #tpu.memory_space<vmem>>, vector<16x128xf32>
    %cst_18 = arith.constant dense<0.000000e+00> : vector<16x128xf32>
    %20 = tpu.matmul %16, %8, %cst_18 {dimension_numbers = #tpu.dot_dimension_numbers<[1], [0], [0], [1], [0, 0, 1, 1], [], []>} : vector<16x128xf32>, vector<128x128xf32>, vector<16x128xf32> -> vector<16x128xf32>
    %21 = arith.addf %19, %20 : vector<16x128xf32>
    %22 = math.tanh %21 : vector<16x128xf32>
    %23 = arith.truncf %22 : vector<16x128xf32> to vector<16x128xbf16>
    %c0_19 = arith.constant 0 : index
    %c256 = arith.constant 256 : index
    %24 = vector.load %arg10[%c0_19, %c256] : memref<16x1024xbf16, #tpu.memory_space<vmem>>, vector<16x128xbf16>
    tpu.vector_store %arg10[%c0_19, %c256], %23 {strides = array<i32>} : memref<16x1024xbf16, #tpu.memory_space<vmem>>, vector<16x128xbf16>,
    %c48 = arith.constant 48 : index
    %c0_20 = arith.constant 0 : index
    %25 = vector.load %arg9[%c48, %c0_20] : memref<128x128xf32, #tpu.memory_space<vmem>>, vector<16x128xf32>
    %cst_21 = arith.constant dense<0.000000e+00> : vector<16x128xf32>
    %26 = tpu.matmul %22, %8, %cst_21 {dimension_numbers = #tpu.dot_dimension_numbers<[1], [0], [0], [1], [0, 0, 1, 1], [], []>} : vector<16x128xf32>, vector<128x128xf32>, vector<16x128xf32> -> vector<16x128xf32>
    %27 = arith.addf %25, %26 : vector<16x128xf32>
    %28 = math.tanh %27 : vector<16x128xf32>
    %29 = arith.truncf %28 : vector<16x128xf32> to vector<16x128xbf16>
    %c0_22 = arith.constant 0 : index
    %c384 = arith.constant 384 : index
    %30 = vector.load %arg10[%c0_22, %c384] : memref<16x1024xbf16, #tpu.memory_space<vmem>>, vector<16x128xbf16>
    tpu.vector_store %arg10[%c0_22, %c384], %29 {strides = array<i32>} : memref<16x1024xbf16, #tpu.memory_space<vmem>>, vector<16x128xbf16>,
    %c64 = arith.constant 64 : index
    %c0_23 = arith.constant 0 : index
    %31 = vector.load %arg9[%c64, %c0_23] : memref<128x128xf32, #tpu.memory_space<vmem>>, vector<16x128xf32>
    %cst_24 = arith.constant dense<0.000000e+00> : vector<16x128xf32>
    %32 = tpu.matmul %28, %8, %cst_24 {dimension_numbers = #tpu.dot_dimension_numbers<[1], [0], [0], [1], [0, 0, 1, 1], [], []>} : vector<16x128xf32>, vector<128x128xf32>, vector<16x128xf32> -> vector<16x128xf32>
    %33 = arith.addf %31, %32 : vector<16x128xf32>
    %34 = math.tanh %33 : vector<16x128xf32>
    %35 = arith.truncf %34 : vector<16x128xf32> to vector<16x128xbf16>
    %c0_25 = arith.constant 0 : index
    %c512 = arith.constant 512 : index
    %36 = vector.load %arg10[%c0_25, %c512] : memref<16x1024xbf16, #tpu.memory_space<vmem>>, vector<16x128xbf16>
    tpu.vector_store %arg10[%c0_25, %c512], %35 {strides = array<i32>} : memref<16x1024xbf16, #tpu.memory_space<vmem>>, vector<16x128xbf16>,
    %c80 = arith.constant 80 : index
    %c0_26 = arith.constant 0 : index
    %37 = vector.load %arg9[%c80, %c0_26] : memref<128x128xf32, #tpu.memory_space<vmem>>, vector<16x128xf32>
    %cst_27 = arith.constant dense<0.000000e+00> : vector<16x128xf32>
    %38 = tpu.matmul %34, %8, %cst_27 {dimension_numbers = #tpu.dot_dimension_numbers<[1], [0], [0], [1], [0, 0, 1, 1], [], []>} : vector<16x128xf32>, vector<128x128xf32>, vector<16x128xf32> -> vector<16x128xf32>
    %39 = arith.addf %37, %38 : vector<16x128xf32>
    %40 = math.tanh %39 : vector<16x128xf32>
    %41 = arith.truncf %40 : vector<16x128xf32> to vector<16x128xbf16>
    %c0_28 = arith.constant 0 : index
    %c640 = arith.constant 640 : index
    %42 = vector.load %arg10[%c0_28, %c640] : memref<16x1024xbf16, #tpu.memory_space<vmem>>, vector<16x128xbf16>
    tpu.vector_store %arg10[%c0_28, %c640], %41 {strides = array<i32>} : memref<16x1024xbf16, #tpu.memory_space<vmem>>, vector<16x128xbf16>,
    %c96 = arith.constant 96 : index
    %c0_29 = arith.constant 0 : index
    %43 = vector.load %arg9[%c96, %c0_29] : memref<128x128xf32, #tpu.memory_space<vmem>>, vector<16x128xf32>
    %cst_30 = arith.constant dense<0.000000e+00> : vector<16x128xf32>
    %44 = tpu.matmul %40, %8, %cst_30 {dimension_numbers = #tpu.dot_dimension_numbers<[1], [0], [0], [1], [0, 0, 1, 1], [], []>} : vector<16x128xf32>, vector<128x128xf32>, vector<16x128xf32> -> vector<16x128xf32>
    %45 = arith.addf %43, %44 : vector<16x128xf32>
    %46 = math.tanh %45 : vector<16x128xf32>
    %47 = arith.truncf %46 : vector<16x128xf32> to vector<16x128xbf16>
    %c0_31 = arith.constant 0 : index
    %c768 = arith.constant 768 : index
    %48 = vector.load %arg10[%c0_31, %c768] : memref<16x1024xbf16, #tpu.memory_space<vmem>>, vector<16x128xbf16>
    tpu.vector_store %arg10[%c0_31, %c768], %47 {strides = array<i32>} : memref<16x1024xbf16, #tpu.memory_space<vmem>>, vector<16x128xbf16>,
    %c112 = arith.constant 112 : index
    %c0_32 = arith.constant 0 : index
    %49 = vector.load %arg9[%c112, %c0_32] : memref<128x128xf32, #tpu.memory_space<vmem>>, vector<16x128xf32>
    %cst_33 = arith.constant dense<0.000000e+00> : vector<16x128xf32>
    %50 = tpu.matmul %46, %8, %cst_33 {dimension_numbers = #tpu.dot_dimension_numbers<[1], [0], [0], [1], [0, 0, 1, 1], [], []>} : vector<16x128xf32>, vector<128x128xf32>, vector<16x128xf32> -> vector<16x128xf32>
    %51 = arith.addf %49, %50 : vector<16x128xf32>
    %52 = math.tanh %51 : vector<16x128xf32>
    %53 = arith.truncf %52 : vector<16x128xf32> to vector<16x128xbf16>
    %c0_34 = arith.constant 0 : index
    %c896 = arith.constant 896 : index
    %54 = vector.load %arg10[%c0_34, %c896] : memref<16x1024xbf16, #tpu.memory_space<vmem>>, vector<16x128xbf16>
    tpu.vector_store %arg10[%c0_34, %c896], %53 {strides = array<i32>} : memref<16x1024xbf16, #tpu.memory_space<vmem>>, vector<16x128xbf16>,
    %c0_35 = arith.constant 0 : index
    %c0_36 = arith.constant 0 : index
    %55 = vector.load %arg10[%c0_35, %c0_36] : memref<16x1024xbf16, #tpu.memory_space<vmem>>, vector<16x1024xbf16>
    %c0_37 = arith.constant 0 : index
    %c0_38 = arith.constant 0 : index
    %56 = vector.load %arg5[%c0_37, %c0_38] : memref<1024x8xbf16, #tpu.memory_space<vmem>>, vector<1024x8xbf16>
    %cst_39 = arith.constant dense<0.000000e+00> : vector<16x8xf32>
    %57 = tpu.matmul %55, %56, %cst_39 {dimension_numbers = #tpu.dot_dimension_numbers<[1], [0], [0], [1], [0, 0, 1, 1], [], []>} : vector<16x1024xbf16>, vector<1024x8xbf16>, vector<16x8xf32> -> vector<16x8xf32>
    %cst_40 = arith.constant dense<0xFF800000> : vector<16xf32>
    %58 = vector.multi_reduction <maximumf>, %57, %cst_40 [1] : vector<16x8xf32> to vector<16xf32>
    %59 = vector.shape_cast %58 : vector<16xf32> to vector<16x1xf32>
    %60 = vector.broadcast %59 : vector<16x1xf32> to vector<16x8xf32>
    %61 = arith.subf %57, %60 : vector<16x8xf32>
    %62 = math.exp %61 : vector<16x8xf32>
    %cst_41 = arith.constant dense<0.000000e+00> : vector<16xf32>
    %63 = vector.multi_reduction <add>, %62, %cst_41 [1] : vector<16x8xf32> to vector<16xf32>
    %64 = vector.shape_cast %63 : vector<16xf32> to vector<16x1xf32>
    %65 = vector.broadcast %64 : vector<16x1xf32> to vector<16x8xf32>
    %66 = arith.divf %62, %65 : vector<16x8xf32>
    %c0_42 = arith.constant 0 : index
    %c0_43 = arith.constant 0 : index
    %67 = vector.load %arg10[%c0_42, %c0_43] : memref<16x1024xbf16, #tpu.memory_space<vmem>>, vector<16x128xbf16>
    %68 = arith.extf %67 : vector<16x128xbf16> to vector<16x128xf32>
    %69 = vector.extract_strided_slice %66 {offsets = [0, 0], sizes = [16, 1], strides = [1, 1]} : vector<16x8xf32> to vector<16x1xf32>
    %70 = vector.broadcast %69 : vector<16x1xf32> to vector<16x128xf32>
    %71 = arith.mulf %68, %70 : vector<16x128xf32>
    %72 = arith.truncf %71 : vector<16x128xf32> to vector<16x128xbf16>
    %c0_44 = arith.constant 0 : index
    %c0_45 = arith.constant 0 : index
    %73 = vector.load %arg10[%c0_44, %c0_45] : memref<16x1024xbf16, #tpu.memory_space<vmem>>, vector<16x128xbf16>
    tpu.vector_store %arg10[%c0_44, %c0_45], %72 {strides = array<i32>} : memref<16x1024xbf16, #tpu.memory_space<vmem>>, vector<16x128xbf16>,
    %c0_46 = arith.constant 0 : index
    %c128_47 = arith.constant 128 : index
    %74 = vector.load %arg10[%c0_46, %c128_47] : memref<16x1024xbf16, #tpu.memory_space<vmem>>, vector<16x128xbf16>
    %75 = arith.extf %74 : vector<16x128xbf16> to vector<16x128xf32>
    %76 = vector.extract_strided_slice %66 {offsets = [0, 1], sizes = [16, 1], strides = [1, 1]} : vector<16x8xf32> to vector<16x1xf32>
    %77 = vector.broadcast %76 : vector<16x1xf32> to vector<16x128xf32>
    %78 = arith.mulf %75, %77 : vector<16x128xf32>
    %79 = arith.truncf %78 : vector<16x128xf32> to vector<16x128xbf16>
    %c0_48 = arith.constant 0 : index
    %c128_49 = arith.constant 128 : index
    %80 = vector.load %arg10[%c0_48, %c128_49] : memref<16x1024xbf16, #tpu.memory_space<vmem>>, vector<16x128xbf16>
    tpu.vector_store %arg10[%c0_48, %c128_49], %79 {strides = array<i32>} : memref<16x1024xbf16, #tpu.memory_space<vmem>>, vector<16x128xbf16>,
    %c0_50 = arith.constant 0 : index
    %c256_51 = arith.constant 256 : index
    %81 = vector.load %arg10[%c0_50, %c256_51] : memref<16x1024xbf16, #tpu.memory_space<vmem>>, vector<16x128xbf16>
    %82 = arith.extf %81 : vector<16x128xbf16> to vector<16x128xf32>
    %83 = vector.extract_strided_slice %66 {offsets = [0, 2], sizes = [16, 1], strides = [1, 1]} : vector<16x8xf32> to vector<16x1xf32>
    %84 = vector.broadcast %83 : vector<16x1xf32> to vector<16x128xf32>
    %85 = arith.mulf %82, %84 : vector<16x128xf32>
    %86 = arith.truncf %85 : vector<16x128xf32> to vector<16x128xbf16>
    %c0_52 = arith.constant 0 : index
    %c256_53 = arith.constant 256 : index
    %87 = vector.load %arg10[%c0_52, %c256_53] : memref<16x1024xbf16, #tpu.memory_space<vmem>>, vector<16x128xbf16>
    tpu.vector_store %arg10[%c0_52, %c256_53], %86 {strides = array<i32>} : memref<16x1024xbf16, #tpu.memory_space<vmem>>, vector<16x128xbf16>,
    %c0_54 = arith.constant 0 : index
    %c384_55 = arith.constant 384 : index
    %88 = vector.load %arg10[%c0_54, %c384_55] : memref<16x1024xbf16, #tpu.memory_space<vmem>>, vector<16x128xbf16>
    %89 = arith.extf %88 : vector<16x128xbf16> to vector<16x128xf32>
    %90 = vector.extract_strided_slice %66 {offsets = [0, 3], sizes = [16, 1], strides = [1, 1]} : vector<16x8xf32> to vector<16x1xf32>
    %91 = vector.broadcast %90 : vector<16x1xf32> to vector<16x128xf32>
    %92 = arith.mulf %89, %91 : vector<16x128xf32>
    %93 = arith.truncf %92 : vector<16x128xf32> to vector<16x128xbf16>
    %c0_56 = arith.constant 0 : index
    %c384_57 = arith.constant 384 : index
    %94 = vector.load %arg10[%c0_56, %c384_57] : memref<16x1024xbf16, #tpu.memory_space<vmem>>, vector<16x128xbf16>
    tpu.vector_store %arg10[%c0_56, %c384_57], %93 {strides = array<i32>} : memref<16x1024xbf16, #tpu.memory_space<vmem>>, vector<16x128xbf16>,
    %c0_58 = arith.constant 0 : index
    %c512_59 = arith.constant 512 : index
    %95 = vector.load %arg10[%c0_58, %c512_59] : memref<16x1024xbf16, #tpu.memory_space<vmem>>, vector<16x128xbf16>
    %96 = arith.extf %95 : vector<16x128xbf16> to vector<16x128xf32>
    %97 = vector.extract_strided_slice %66 {offsets = [0, 4], sizes = [16, 1], strides = [1, 1]} : vector<16x8xf32> to vector<16x1xf32>
    %98 = vector.broadcast %97 : vector<16x1xf32> to vector<16x128xf32>
    %99 = arith.mulf %96, %98 : vector<16x128xf32>
    %100 = arith.truncf %99 : vector<16x128xf32> to vector<16x128xbf16>
    %c0_60 = arith.constant 0 : index
    %c512_61 = arith.constant 512 : index
    %101 = vector.load %arg10[%c0_60, %c512_61] : memref<16x1024xbf16, #tpu.memory_space<vmem>>, vector<16x128xbf16>
    tpu.vector_store %arg10[%c0_60, %c512_61], %100 {strides = array<i32>} : memref<16x1024xbf16, #tpu.memory_space<vmem>>, vector<16x128xbf16>,
    %c0_62 = arith.constant 0 : index
    %c640_63 = arith.constant 640 : index
    %102 = vector.load %arg10[%c0_62, %c640_63] : memref<16x1024xbf16, #tpu.memory_space<vmem>>, vector<16x128xbf16>
    %103 = arith.extf %102 : vector<16x128xbf16> to vector<16x128xf32>
    %104 = vector.extract_strided_slice %66 {offsets = [0, 5], sizes = [16, 1], strides = [1, 1]} : vector<16x8xf32> to vector<16x1xf32>
    %105 = vector.broadcast %104 : vector<16x1xf32> to vector<16x128xf32>
    %106 = arith.mulf %103, %105 : vector<16x128xf32>
    %107 = arith.truncf %106 : vector<16x128xf32> to vector<16x128xbf16>
    %c0_64 = arith.constant 0 : index
    %c640_65 = arith.constant 640 : index
    %108 = vector.load %arg10[%c0_64, %c640_65] : memref<16x1024xbf16, #tpu.memory_space<vmem>>, vector<16x128xbf16>
    tpu.vector_store %arg10[%c0_64, %c640_65], %107 {strides = array<i32>} : memref<16x1024xbf16, #tpu.memory_space<vmem>>, vector<16x128xbf16>,
    %c0_66 = arith.constant 0 : index
    %c768_67 = arith.constant 768 : index
    %109 = vector.load %arg10[%c0_66, %c768_67] : memref<16x1024xbf16, #tpu.memory_space<vmem>>, vector<16x128xbf16>
    %110 = arith.extf %109 : vector<16x128xbf16> to vector<16x128xf32>
    %111 = vector.extract_strided_slice %66 {offsets = [0, 6], sizes = [16, 1], strides = [1, 1]} : vector<16x8xf32> to vector<16x1xf32>
    %112 = vector.broadcast %111 : vector<16x1xf32> to vector<16x128xf32>
    %113 = arith.mulf %110, %112 : vector<16x128xf32>
    %114 = arith.truncf %113 : vector<16x128xf32> to vector<16x128xbf16>
    %c0_68 = arith.constant 0 : index
    %c768_69 = arith.constant 768 : index
    %115 = vector.load %arg10[%c0_68, %c768_69] : memref<16x1024xbf16, #tpu.memory_space<vmem>>, vector<16x128xbf16>
    tpu.vector_store %arg10[%c0_68, %c768_69], %114 {strides = array<i32>} : memref<16x1024xbf16, #tpu.memory_space<vmem>>, vector<16x128xbf16>,
    %c0_70 = arith.constant 0 : index
    %c896_71 = arith.constant 896 : index
    %116 = vector.load %arg10[%c0_70, %c896_71] : memref<16x1024xbf16, #tpu.memory_space<vmem>>, vector<16x128xbf16>
    %117 = arith.extf %116 : vector<16x128xbf16> to vector<16x128xf32>
    %118 = vector.extract_strided_slice %66 {offsets = [0, 7], sizes = [16, 1], strides = [1, 1]} : vector<16x8xf32> to vector<16x1xf32>
    %119 = vector.broadcast %118 : vector<16x1xf32> to vector<16x128xf32>
    %120 = arith.mulf %117, %119 : vector<16x128xf32>
    %121 = arith.truncf %120 : vector<16x128xf32> to vector<16x128xbf16>
    %c0_72 = arith.constant 0 : index
    %c896_73 = arith.constant 896 : index
    %122 = vector.load %arg10[%c0_72, %c896_73] : memref<16x1024xbf16, #tpu.memory_space<vmem>>, vector<16x128xbf16>
    tpu.vector_store %arg10[%c0_72, %c896_73], %121 {strides = array<i32>} : memref<16x1024xbf16, #tpu.memory_space<vmem>>, vector<16x128xbf16>,
    %c0_74 = arith.constant 0 : index
    %c0_75 = arith.constant 0 : index
    %123 = vector.load %arg10[%c0_74, %c0_75] : memref<16x1024xbf16, #tpu.memory_space<vmem>>, vector<16x1024xbf16>
    %c0_76 = arith.constant 0 : index
    %c0_77 = arith.constant 0 : index
    %124 = vector.load %arg6[%c0_76, %c0_77] : memref<1024x8xbf16, #tpu.memory_space<vmem>>, vector<1024x8xbf16>
    %cst_78 = arith.constant dense<0.000000e+00> : vector<16x8xf32>
    %125 = tpu.matmul %123, %124, %cst_78 {dimension_numbers = #tpu.dot_dimension_numbers<[1], [0], [0], [1], [0, 0, 1, 1], [], []>} : vector<16x1024xbf16>, vector<1024x8xbf16>, vector<16x8xf32> -> vector<16x8xf32>
    %c0_79 = arith.constant 0 : index
    %c0_80 = arith.constant 0 : index
    %126 = vector.load %arg7[%c0_79, %c0_80] : memref<1x8xf32, #tpu.memory_space<vmem>>, vector<1x8xf32>
    %127 = vector.broadcast %126 : vector<1x8xf32> to vector<16x8xf32>
    %128 = arith.addf %125, %127 : vector<16x8xf32>
    %c0_81 = arith.constant 0 : index
    %c0_82 = arith.constant 0 : index
    %129 = vector.load %arg8[%c0_81, %c0_82] : memref<16x8xf32, #tpu.memory_space<vmem>>, vector<16x8xf32>
    tpu.vector_store %arg8[%c0_81, %c0_82], %128 {strides = array<i32>} : memref<16x8xf32, #tpu.memory_space<vmem>>, vector<16x8xf32>,
    return
  }
  func.func @transform_0(%arg0: i32) -> (i32, i32, i32) {
    %c0_i32 = arith.constant 0 : i32
    %c0_i32_0 = arith.constant 0 : i32
    %c0_i32_1 = arith.constant 0 : i32
    return %c0_i32, %arg0, %c0_i32_0 : i32, i32, i32
  }
  func.func @transform_1(%arg0: i32) -> (i32, i32) {
    %c0_i32 = arith.constant 0 : i32
    %c0_i32_0 = arith.constant 0 : i32
    %c0_i32_1 = arith.constant 0 : i32
    return %c0_i32, %c0_i32_0 : i32, i32
  }
  func.func @transform_2(%arg0: i32) -> (i32, i32) {
    %c0_i32 = arith.constant 0 : i32
    %c0_i32_0 = arith.constant 0 : i32
    %c0_i32_1 = arith.constant 0 : i32
    return %c0_i32, %c0_i32_0 : i32, i32
  }
  func.func @transform_3(%arg0: i32) -> (i32, i32) {
    %c0_i32 = arith.constant 0 : i32
    %c0_i32_0 = arith.constant 0 : i32
    %c0_i32_1 = arith.constant 0 : i32
    return %c0_i32, %c0_i32_0 : i32, i32
  }
  func.func @transform_4(%arg0: i32) -> (i32, i32) {
    %c0_i32 = arith.constant 0 : i32
    %c0_i32_0 = arith.constant 0 : i32
    %c0_i32_1 = arith.constant 0 : i32
    return %c0_i32, %c0_i32_0 : i32, i32
  }
  func.func @transform_5(%arg0: i32) -> (i32, i32) {
    %c0_i32 = arith.constant 0 : i32
    %c0_i32_0 = arith.constant 0 : i32
    %c0_i32_1 = arith.constant 0 : i32
    return %c0_i32, %c0_i32_0 : i32, i32
  }
  func.func @transform_6(%arg0: i32) -> (i32, i32) {
    %c0_i32 = arith.constant 0 : i32
    %c0_i32_0 = arith.constant 0 : i32
    %c0_i32_1 = arith.constant 0 : i32
    return %c0_i32, %c0_i32_0 : i32, i32
  }
  func.func @transform_7(%arg0: i32) -> (i32, i32) {
    %c0_i32 = arith.constant 0 : i32
    %c0_i32_0 = arith.constant 0 : i32
    return %arg0, %c0_i32 : i32, i32
  }
}

</mosaic_0001>

<llo_original>
// kernel: tpu_custom_call.1
$region0: #{tpu_custom_call.1}
  #allocation0 [shape = 'u32[]', space=smem, size = 0x4, offset = 0x4, fixed_abs, tag = 'smem constant byte address 0x4 - core index']
  #allocation1 [shape = 'u32[144,128]{1,0:T(1,128)}', space=vmem, size = 0x12000, scoped, tag = 'internal scratch']
  #allocation2 [shape = 'f32[128,128]{1,0:T(8,128)}', space=vmem, size = 0x10000, scoped, tag = 'scratch operand']
  #allocation3 [shape = 'bf16[16,1024]{1,0:T(8,128)(2,1)}', space=vmem, size = 0x8000, scoped, tag = 'scratch operand']
  %s0 = inlined_call_operand.vmem [shape: bf16[8,16,16], index: 0, kind: input, shape index: {}]
  %s1 = inlined_call_operand.vmem [shape: bf16[16,128], index: 1, kind: input, shape index: {}]
  %s2 = inlined_call_operand.vmem [shape: f32[128,128], index: 2, kind: input, shape index: {}]
  %s3 = inlined_call_operand.vmem [shape: f32[1,128], index: 3, kind: input, shape index: {}]
  %s4 = inlined_call_operand.vmem [shape: bf16[1024,8], index: 4, kind: input, shape index: {}]
  %s5 = inlined_call_operand.vmem [shape: bf16[1024,8], index: 5, kind: input, shape index: {}]
  %s6 = inlined_call_operand.vmem [shape: f32[1,8], index: 6, kind: input, shape index: {}]
  %s7 = inlined_call_operand.vmem [shape: f32[16,8], index: 7, kind: output, shape index: {}]
  %s8 = sld [smem:[#allocation0]]
  $region38: #{tpu_custom_call.1} parent=0
    _
  %s10 = ssub.s32 1, %s8
  %s11 = scalar_select 0, %s10, %s8
  // Predicated region
  $region2: #{tpu_custom_call.1} parent=0 // pred_check
    _
  $region3: #{tpu_custom_call.1} parent=0 // pred_check_branch
    %13 = sbr.rel (0) target = $region5
  $region4: #{tpu_custom_call.1} parent=0 // pred_region
    _
  $region5: #{tpu_custom_call.1} parent=0 // pred_fallthru
    _
  // Predicated region
  $region6: #{tpu_custom_call.1} parent=0 // pred_check
    _
  $region7: #{tpu_custom_call.1} parent=0 // pred_check_branch
    %15 = sbr.rel (0) target = $region9
  $region8: #{tpu_custom_call.1} parent=0 // pred_region
    _
  $region9: #{tpu_custom_call.1} parent=0 // pred_fallthru
    _
  // Predicated region
  $region10: #{tpu_custom_call.1} parent=0 // pred_check
    _
  $region11: #{tpu_custom_call.1} parent=0 // pred_check_branch
    %17 = sbr.rel (0) target = $region13
  $region12: #{tpu_custom_call.1} parent=0 // pred_region
    _
  $region13: #{tpu_custom_call.1} parent=0 // pred_fallthru
    _
  // Predicated region
  $region14: #{tpu_custom_call.1} parent=0 // pred_check
    _
  $region15: #{tpu_custom_call.1} parent=0 // pred_check_branch
    %19 = sbr.rel (0) target = $region17
  $region16: #{tpu_custom_call.1} parent=0 // pred_region
    _
  $region17: #{tpu_custom_call.1} parent=0 // pred_fallthru
    _
  // Predicated region
  $region18: #{tpu_custom_call.1} parent=0 // pred_check
    _
  $region19: #{tpu_custom_call.1} parent=0 // pred_check_branch
    %21 = sbr.rel (0) target = $region21
  $region20: #{tpu_custom_call.1} parent=0 // pred_region
    _
  $region21: #{tpu_custom_call.1} parent=0 // pred_fallthru
    _
  // Predicated region
  $region22: #{tpu_custom_call.1} parent=0 // pred_check
    _
  $region23: #{tpu_custom_call.1} parent=0 // pred_check_branch
    %23 = sbr.rel (0) target = $region25
  $region24: #{tpu_custom_call.1} parent=0 // pred_region
    _
  $region25: #{tpu_custom_call.1} parent=0 // pred_fallthru
    _
  // Predicated region
  $region26: #{tpu_custom_call.1} parent=0 // pred_check
    _
  $region27: #{tpu_custom_call.1} parent=0 // pred_check_branch
    %25 = sbr.rel (0) target = $region29
  $region28: #{tpu_custom_call.1} parent=0 // pred_region
    _
  $region29: #{tpu_custom_call.1} parent=0 // pred_fallthru
    _
  %v27 = vld [vmem:[%s0] sm:$0xf]
  %v28 = vld [vmem:[%s0 + $0x4] sm:$0xf]
  %v29 = vld [vmem:[%s0 + $0x8] sm:$0xf]
  %v30 = vld [vmem:[%s0 + $0xc] sm:$0xf]
  %v31 = vld [vmem:[%s0 + $0x10] sm:$0xf]
  %v32 = vld [vmem:[%s0 + $0x14] sm:$0xf]
  %v33 = vld [vmem:[%s0 + $0x18] sm:$0xf]
  %v34 = vld [vmem:[%s0 + $0x1c] sm:$0xf]
  %v35 = vld [vmem:[%s0 + $0x20] sm:$0xf]
  %v36 = vld [vmem:[%s0 + $0x24] sm:$0xf]
  %v37 = vld [vmem:[%s0 + $0x28] sm:$0xf]
  %v38 = vld [vmem:[%s0 + $0x2c] sm:$0xf]
  %v39 = vld [vmem:[%s0 + $0x30] sm:$0xf]
  %v40 = vld [vmem:[%s0 + $0x34] sm:$0xf]
  %v41 = vld [vmem:[%s0 + $0x38] sm:$0xf]
  %v42 = vld [vmem:[%s0 + $0x3c] sm:$0xf]
  %v43 = vld [vmem:[%s1] sm:$0xf]
  %v44 = vld [vmem:[%s1 + $0x4] sm:$0xf]
  %v45 = vld [vmem:[%s3] sm:$0x1]
  %v47 = vlaneseq
  %v48 = vshrl.u32 %v47, 7
  %v49 = vsub.s32 0, %v48
  %v50 = vrot.slane %v45, %v49
  %v68 = vunpack.c.l.b16 %v27
  %v69 = vunpack.c.l.b16 %v28
  %v70 = vunpack.c.l.b16 %v29
  %v71 = vunpack.c.l.b16 %v30
  %v72 = vunpack.c.l.b16 %v31
  %v73 = vunpack.c.l.b16 %v32
  %v74 = vunpack.c.l.b16 %v33
  %v75 = vunpack.c.l.b16 %v34
  %v76 = vunpack.c.l.b16 %v35
  %v77 = vunpack.c.l.b16 %v36
  %v78 = vunpack.c.l.b16 %v37
  %v79 = vunpack.c.l.b16 %v38
  %v80 = vunpack.c.l.b16 %v39
  %v81 = vunpack.c.l.b16 %v40
  %v82 = vunpack.c.l.b16 %v41
  %v83 = vunpack.c.l.b16 %v42
  %v84 = vpack.c.b16 %v69, %v68
  %v85 = vpack.c.b16 %v71, %v70
  %v86 = vpack.c.b16 %v73, %v72
  %v87 = vpack.c.b16 %v75, %v74
  %v88 = vpack.c.b16 %v77, %v76
  %v89 = vpack.c.b16 %v79, %v78
  %v90 = vpack.c.b16 %v81, %v80
  %v91 = vpack.c.b16 %v83, %v82
  %v94 = vunpack.c.l.b16 %v43
  %v95 = vunpack.c.l.b16 %v44
  %v96 = vpack.c.b16 %v95, %v94
  %vm98 = vcmask 130048
  %v100 = vsel %vm98, %v84, 0
  %v103 = vsel %vm98, %v85, 0
  %v106 = vsel %vm98, %v86, 0
  %v109 = vsel %vm98, %v87, 0
  %v112 = vsel %vm98, %v88, 0
  %v115 = vsel %vm98, %v89, 0
  %v118 = vsel %vm98, %v90, 0
  %v121 = vsel %vm98, %v91, 0
  %123 = vmatprep.subr.bf16.mxu0 0
  %124 = vmatpush1.bf16.msra.mxu0 0
  %125 = vmatprep.subr.bf16.mxu0 0
  %126 = vmatpush1.bf16.msra.mxu0 0
  %127 = vmatprep.subr.bf16.mxu0 0
  %128 = vmatpush1.bf16.msra.mxu0 0
  %129 = vmatprep.subr.bf16.mxu0 0
  %130 = vmatpush1.bf16.msra.mxu0 0
  %131 = vmatprep.subr.bf16.mxu0 0
  %132 = vmatpush1.bf16.msra.mxu0 0
  %133 = vmatprep.subr.bf16.mxu0 0
  %134 = vmatpush1.bf16.msra.mxu0 0
  %135 = vmatprep.subr.bf16.mxu0 0
  %136 = vmatpush1.bf16.msra.mxu0 0
  %137 = vmatprep.subr.bf16.mxu0 0
  %138 = vmatpush1.bf16.msra.mxu0 %v96
  %139 = vmatprep.subr.bf16.mxu0 0
  %140 = vmatpush2.bf16.msra.mxu0 0
  %141 = vmatprep.subr.bf16.mxu0 0
  %142 = vmatpush2.bf16.msra.mxu0 0
  %143 = vmatprep.subr.bf16.mxu0 0
  %144 = vmatpush2.bf16.msra.mxu0 0
  %145 = vmatprep.subr.bf16.mxu0 0
  %146 = vmatpush2.bf16.msra.mxu0 0
  %147 = vmatprep.subr.bf16.mxu0 0
  %148 = vmatpush2.bf16.msra.mxu0 0
  %149 = vmatprep.subr.bf16.mxu0 0
  %150 = vmatpush2.bf16.msra.mxu0 0
  %151 = vmatprep.subr.bf16.mxu0 0
  %152 = vmatpush2.bf16.msra.mxu0 0
  %153 = vmatprep.subr.bf16.mxu0 0
  %154 = vmatpush2.bf16.msra.mxu0 0
  %155 = vmatprep.mubr.bf16.mxu0 0
  %156 = vmatmul.mubr.bf16.gmra.mxu0 %v100
  %v157 = vpop.f32.mrf.mxu0
  %v158 = vadd.f32 %v50, %v157
  %v159 = vpop.f32.mrf.mxu0
  %v160 = vpop.f32.mrf.mxu0
  %v161 = vadd.f32 %v50, %v160
  %v162 = vpop.f32.mrf.mxu0
  %163 = vmatprep.mubr.bf16.mxu0 0
  %164 = vmatmul.mubr.bf16.gmra.mxu0 %v103
  %v165 = vpop.f32.mrf.mxu0
  %v166 = vadd.f32 %v50, %v165
  %v167 = vpop.f32.mrf.mxu0
  %v168 = vpop.f32.mrf.mxu0
  %v169 = vadd.f32 %v50, %v168
  %v170 = vpop.f32.mrf.mxu0
  %171 = vmatprep.mubr.bf16.mxu0 0
  %172 = vmatmul.mubr.bf16.gmra.mxu0 %v106
  %v173 = vpop.f32.mrf.mxu0
  %v174 = vadd.f32 %v50, %v173
  %v175 = vpop.f32.mrf.mxu0
  %v176 = vpop.f32.mrf.mxu0
  %v177 = vadd.f32 %v50, %v176
  %v178 = vpop.f32.mrf.mxu0
  %179 = vmatprep.mubr.bf16.mxu0 0
  %180 = vmatmul.mubr.bf16.gmra.mxu0 %v109
  %v181 = vpop.f32.mrf.mxu0
  %v182 = vadd.f32 %v50, %v181
  %v183 = vpop.f32.mrf.mxu0
  %v184 = vpop.f32.mrf.mxu0
  %v185 = vadd.f32 %v50, %v184
  %v186 = vpop.f32.mrf.mxu0
  %187 = vmatprep.mubr.bf16.mxu0 0
  %188 = vmatmul.mubr.bf16.gmra.mxu0 %v112
  %v189 = vpop.f32.mrf.mxu0
  %v190 = vadd.f32 %v50, %v189
  %v191 = vpop.f32.mrf.mxu0
  %v192 = vpop.f32.mrf.mxu0
  %v193 = vadd.f32 %v50, %v192
  %v194 = vpop.f32.mrf.mxu0
  %195 = vmatprep.mubr.bf16.mxu0 0
  %196 = vmatmul.mubr.bf16.gmra.mxu0 %v115
  %v197 = vpop.f32.mrf.mxu0
  %v198 = vadd.f32 %v50, %v197
  %v199 = vpop.f32.mrf.mxu0
  %v200 = vpop.f32.mrf.mxu0
  %v201 = vadd.f32 %v50, %v200
  %v202 = vpop.f32.mrf.mxu0
  %203 = vmatprep.mubr.bf16.mxu0 0
  %204 = vmatmul.mubr.bf16.gmra.mxu0 %v118
  %v205 = vpop.f32.mrf.mxu0
  %v206 = vadd.f32 %v50, %v205
  %v207 = vpop.f32.mrf.mxu0
  %v208 = vpop.f32.mrf.mxu0
  %v209 = vadd.f32 %v50, %v208
  %v210 = vpop.f32.mrf.mxu0
  %211 = vmatprep.mubr.bf16.mxu0 0
  %212 = vmatmul.mubr.bf16.gmra.mxu0 %v121
  %v213 = vpop.f32.mrf.mxu0
  %v214 = vadd.f32 %v50, %v213
  %v215 = vpop.f32.mrf.mxu0
  %v216 = vpop.f32.mrf.mxu0
  %v217 = vadd.f32 %v50, %v216
  %v218 = vpop.f32.mrf.mxu0
  %219 = vdwg.mxu0
  %220 = vst [vmem:[#allocation2] sm:$0xff] %v158
  %221 = vst [vmem:[#allocation2 + $0x8] sm:$0xff] %v161
  %222 = vst [vmem:[#allocation2 + $0x10] sm:$0xff] %v166
  %223 = vst [vmem:[#allocation2 + $0x18] sm:$0xff] %v169
  %224 = vst [vmem:[#allocation2 + $0x20] sm:$0xff] %v174
  %225 = vst [vmem:[#allocation2 + $0x28] sm:$0xff] %v177
  %226 = vst [vmem:[#allocation2 + $0x30] sm:$0xff] %v182
  %227 = vst [vmem:[#allocation2 + $0x38] sm:$0xff] %v185
  %228 = vst [vmem:[#allocation2 + $0x40] sm:$0xff] %v190
  %229 = vst [vmem:[#allocation2 + $0x48] sm:$0xff] %v193
  %230 = vst [vmem:[#allocation2 + $0x50] sm:$0xff] %v198
  %231 = vst [vmem:[#allocation2 + $0x58] sm:$0xff] %v201
  %232 = vst [vmem:[#allocation2 + $0x60] sm:$0xff] %v206
  %233 = vst [vmem:[#allocation2 + $0x68] sm:$0xff] %v209
  %234 = vst [vmem:[#allocation2 + $0x70] sm:$0xff] %v214
  %235 = vst [vmem:[#allocation2 + $0x78] sm:$0xff] %v217
  %v236 = vld [vmem:[%s2] sm:$0xff]
  %v237 = vld [vmem:[%s2 + $0x8] sm:$0xff]
  %v238 = vld [vmem:[%s2 + $0x10] sm:$0xff]
  %v239 = vld [vmem:[%s2 + $0x18] sm:$0xff]
  %v240 = vld [vmem:[%s2 + $0x20] sm:$0xff]
  %v241 = vld [vmem:[%s2 + $0x28] sm:$0xff]
  %v242 = vld [vmem:[%s2 + $0x30] sm:$0xff]
  %v243 = vld [vmem:[%s2 + $0x38] sm:$0xff]
  %v244 = vld [vmem:[%s2 + $0x40] sm:$0xff]
  %v245 = vld [vmem:[%s2 + $0x48] sm:$0xff]
  %v246 = vld [vmem:[%s2 + $0x50] sm:$0xff]
  %v247 = vld [vmem:[%s2 + $0x58] sm:$0xff]
  %v248 = vld [vmem:[%s2 + $0x60] sm:$0xff]
  %v249 = vld [vmem:[%s2 + $0x68] sm:$0xff]
  %v250 = vld [vmem:[%s2 + $0x70] sm:$0xff]
  %v251 = vld [vmem:[%s2 + $0x78] sm:$0xff]
  %v252 = vld [vmem:[#allocation2] sm:$0xff]
  %v253 = vld [vmem:[#allocation2 + $0x8] sm:$0xff]
  %v254 = vtanh.pop %v252
  %v255 = vtanh.pop %v253
  %v256 = vpack.c.bf16 %v255, %v254
  %v258 = vunpack.c.l.b16 %v256
  %v259 = vunpack.c.h.b16 %v256
  %v260 = vpack.c.b16 %v258, %v258
  %v261 = vpack.c.b16 %v259, %v259
  %264 = vst [vmem:[#allocation3] sm:$0xf] %v260
  %265 = vst [vmem:[#allocation3 + $0x20] sm:$0xf] %v261
  %v266 = vld [vmem:[#allocation2 + $0x10] sm:$0xff]
  %v267 = vld [vmem:[#allocation2 + $0x18] sm:$0xff]
  %268 = vmatprep.subr.mxu0 0.0
  %269 = vmatpush1.msra.mxu0 %v251
  %270 = vmatprep.subr.mxu0 0.0
  %271 = vmatpush1.msra.mxu0 %v250
  %272 = vmatprep.subr.mxu0 0.0
  %273 = vmatpush1.msra.mxu0 %v249
  %274 = vmatprep.subr.mxu0 0.0
  %275 = vmatpush1.msra.mxu0 %v248
  %276 = vmatprep.subr.mxu0 0.0
  %277 = vmatpush1.msra.mxu0 %v247
  %278 = vmatprep.subr.mxu0 0.0
  %279 = vmatpush1.msra.mxu0 %v246
  %280 = vmatprep.subr.mxu0 0.0
  %281 = vmatpush1.msra.mxu0 %v245
  %282 = vmatprep.subr.mxu0 0.0
  %283 = vmatpush1.msra.mxu0 %v244
  %284 = vmatprep.subr.mxu0 0.0
  %285 = vmatpush1.msra.mxu0 %v243
  %286 = vmatprep.subr.mxu0 0.0
  %287 = vmatpush1.msra.mxu0 %v242
  %288 = vmatprep.subr.mxu0 0.0
  %289 = vmatpush1.msra.mxu0 %v241
  %290 = vmatprep.subr.mxu0 0.0
  %291 = vmatpush1.msra.mxu0 %v240
  %292 = vmatprep.subr.mxu0 0.0
  %293 = vmatpush1.msra.mxu0 %v239
  %294 = vmatprep.subr.mxu0 0.0
  %295 = vmatpush1.msra.mxu0 %v238
  %296 = vmatprep.subr.mxu0 0.0
  %297 = vmatpush1.msra.mxu0 %v237
  %298 = vmatprep.subr.mxu0 0.0
  %299 = vmatpush1.msra.mxu0 %v236
  %300 = vmatprep.subr.mxu0 0.0
  %301 = vmatpush2.msra.mxu0 0.0
  %302 = vmatprep.subr.mxu0 0.0
  %303 = vmatpush2.msra.mxu0 0.0
  %304 = vmatprep.subr.mxu0 0.0
  %305 = vmatpush2.msra.mxu0 0.0
  %306 = vmatprep.subr.mxu0 0.0
  %307 = vmatpush2.msra.mxu0 0.0
  %308 = vmatprep.subr.mxu0 0.0
  %309 = vmatpush2.msra.mxu0 0.0
  %310 = vmatprep.subr.mxu0 0.0
  %311 = vmatpush2.msra.mxu0 0.0
  %312 = vmatprep.subr.mxu0 0.0
  %313 = vmatpush2.msra.mxu0 0.0
  %314 = vmatprep.subr.mxu0 0.0
  %315 = vmatpush2.msra.mxu0 0.0
  %316 = vmatprep.subr.mxu0 0.0
  %317 = vmatpush2.msra.mxu0 0.0
  %318 = vmatprep.subr.mxu0 0.0
  %319 = vmatpush2.msra.mxu0 0.0
  %320 = vmatprep.subr.mxu0 0.0
  %321 = vmatpush2.msra.mxu0 0.0
  %322 = vmatprep.subr.mxu0 0.0
  %323 = vmatpush2.msra.mxu0 0.0
  %324 = vmatprep.subr.mxu0 0.0
  %325 = vmatpush2.msra.mxu0 0.0
  %326 = vmatprep.subr.mxu0 0.0
  %327 = vmatpush2.msra.mxu0 0.0
  %328 = vmatprep.subr.mxu0 0.0
  %329 = vmatpush2.msra.mxu0 0.0
  %330 = vmatprep.subr.mxu0 0.0
  %331 = vmatpush2.msra.mxu0 0.0
  %332 = vmatprep.mubr.f32.mxu0 0.0
  %333 = vmatmul.mubr.f32.gmra.mxu0 %v254
  %v334 = vpop.f32.mrf.mxu0
  %v335 = vadd.f32 0.0, %v334
  %v336 = vpop.f32.mrf.mxu0
  %337 = vmatprep.mubr.f32.mxu0 0.0
  %338 = vmatmul.mubr.f32.gmra.mxu0 %v255
  %v339 = vpop.f32.mrf.mxu0
  %v340 = vadd.f32 0.0, %v339
  %v341 = vpop.f32.mrf.mxu0
  %342 = vdwg.mxu0
  %v343 = vadd.f32 %v266, %v335
  %v344 = vadd.f32 %v267, %v340
  %v345 = vtanh.pop %v343
  %v346 = vtanh.pop %v344
  %v347 = vpack.c.bf16 %v346, %v345
  %v349 = vunpack.c.l.b16 %v347
  %v350 = vunpack.c.h.b16 %v347
  %v351 = vpack.c.b16 %v349, %v349
  %v352 = vpack.c.b16 %v350, %v350
  %355 = vst [vmem:[#allocation3 + $0x4] sm:$0xf] %v351
  %356 = vst [vmem:[#allocation3 + $0x24] sm:$0xf] %v352
  %v357 = vld [vmem:[#allocation2 + $0x20] sm:$0xff]
  %v358 = vld [vmem:[#allocation2 + $0x28] sm:$0xff]
  %359 = vmatprep.subr.mxu0 0.0
  %360 = vmatpush1.msra.mxu0 %v251
  %361 = vmatprep.subr.mxu0 0.0
  %362 = vmatpush1.msra.mxu0 %v250
  %363 = vmatprep.subr.mxu0 0.0
  %364 = vmatpush1.msra.mxu0 %v249
  %365 = vmatprep.subr.mxu0 0.0
  %366 = vmatpush1.msra.mxu0 %v248
  %367 = vmatprep.subr.mxu0 0.0
  %368 = vmatpush1.msra.mxu0 %v247
  %369 = vmatprep.subr.mxu0 0.0
  %370 = vmatpush1.msra.mxu0 %v246
  %371 = vmatprep.subr.mxu0 0.0
  %372 = vmatpush1.msra.mxu0 %v245
  %373 = vmatprep.subr.mxu0 0.0
  %374 = vmatpush1.msra.mxu0 %v244
  %375 = vmatprep.subr.mxu0 0.0
  %376 = vmatpush1.msra.mxu0 %v243
  %377 = vmatprep.subr.mxu0 0.0
  %378 = vmatpush1.msra.mxu0 %v242
  %379 = vmatprep.subr.mxu0 0.0
  %380 = vmatpush1.msra.mxu0 %v241
  %381 = vmatprep.subr.mxu0 0.0
  %382 = vmatpush1.msra.mxu0 %v240
  %383 = vmatprep.subr.mxu0 0.0
  %384 = vmatpush1.msra.mxu0 %v239
  %385 = vmatprep.subr.mxu0 0.0
  %386 = vmatpush1.msra.mxu0 %v238
  %387 = vmatprep.subr.mxu0 0.0
  %388 = vmatpush1.msra.mxu0 %v237
  %389 = vmatprep.subr.mxu0 0.0
  %390 = vmatpush1.msra.mxu0 %v236
  %391 = vmatprep.subr.mxu0 0.0
  %392 = vmatpush2.msra.mxu0 0.0
  %393 = vmatprep.subr.mxu0 0.0
  %394 = vmatpush2.msra.mxu0 0.0
  %395 = vmatprep.subr.mxu0 0.0
  %396 = vmatpush2.msra.mxu0 0.0
  %397 = vmatprep.subr.mxu0 0.0
  %398 = vmatpush2.msra.mxu0 0.0
  %399 = vmatprep.subr.mxu0 0.0
  %400 = vmatpush2.msra.mxu0 0.0
  %401 = vmatprep.subr.mxu0 0.0
  %402 = vmatpush2.msra.mxu0 0.0
  %403 = vmatprep.subr.mxu0 0.0
  %404 = vmatpush2.msra.mxu0 0.0
  %405 = vmatprep.subr.mxu0 0.0
  %406 = vmatpush2.msra.mxu0 0.0
  %407 = vmatprep.subr.mxu0 0.0
  %408 = vmatpush2.msra.mxu0 0.0
  %409 = vmatprep.subr.mxu0 0.0
  %410 = vmatpush2.msra.mxu0 0.0
  %411 = vmatprep.subr.mxu0 0.0
  %412 = vmatpush2.msra.mxu0 0.0
  %413 = vmatprep.subr.mxu0 0.0
  %414 = vmatpush2.msra.mxu0 0.0
  %415 = vmatprep.subr.mxu0 0.0
  %416 = vmatpush2.msra.mxu0 0.0
  %417 = vmatprep.subr.mxu0 0.0
  %418 = vmatpush2.msra.mxu0 0.0
  %419 = vmatprep.subr.mxu0 0.0
  %420 = vmatpush2.msra.mxu0 0.0
  %421 = vmatprep.subr.mxu0 0.0
  %422 = vmatpush2.msra.mxu0 0.0
  %423 = vmatprep.mubr.f32.mxu0 0.0
  %424 = vmatmul.mubr.f32.gmra.mxu0 %v345
  %v425 = vpop.f32.mrf.mxu0
  %v426 = vadd.f32 0.0, %v425
  %v427 = vpop.f32.mrf.mxu0
  %428 = vmatprep.mubr.f32.mxu0 0.0
  %429 = vmatmul.mubr.f32.gmra.mxu0 %v346
  %v430 = vpop.f32.mrf.mxu0
  %v431 = vadd.f32 0.0, %v430
  %v432 = vpop.f32.mrf.mxu0
  %433 = vdwg.mxu0
  %v434 = vadd.f32 %v357, %v426
  %v435 = vadd.f32 %v358, %v431
  %v436 = vtanh.pop %v434
  %v437 = vtanh.pop %v435
  %v438 = vpack.c.bf16 %v437, %v436
  %v440 = vunpack.c.l.b16 %v438
  %v441 = vunpack.c.h.b16 %v438
  %v442 = vpack.c.b16 %v440, %v440
  %v443 = vpack.c.b16 %v441, %v441
  %446 = vst [vmem:[#allocation3 + $0x8] sm:$0xf] %v442
  %447 = vst [vmem:[#allocation3 + $0x28] sm:$0xf] %v443
  %v448 = vld [vmem:[#allocation2 + $0x30] sm:$0xff]
  %v449 = vld [vmem:[#allocation2 + $0x38] sm:$0xff]
  %450 = vmatprep.subr.mxu0 0.0
  %451 = vmatpush1.msra.mxu0 %v251
  %452 = vmatprep.subr.mxu0 0.0
  %453 = vmatpush1.msra.mxu0 %v250
  %454 = vmatprep.subr.mxu0 0.0
  %455 = vmatpush1.msra.mxu0 %v249
  %456 = vmatprep.subr.mxu0 0.0
  %457 = vmatpush1.msra.mxu0 %v248
  %458 = vmatprep.subr.mxu0 0.0
  %459 = vmatpush1.msra.mxu0 %v247
  %460 = vmatprep.subr.mxu0 0.0
  %461 = vmatpush1.msra.mxu0 %v246
  %462 = vmatprep.subr.mxu0 0.0
  %463 = vmatpush1.msra.mxu0 %v245
  %464 = vmatprep.subr.mxu0 0.0
  %465 = vmatpush1.msra.mxu0 %v244
  %466 = vmatprep.subr.mxu0 0.0
  %467 = vmatpush1.msra.mxu0 %v243
  %468 = vmatprep.subr.mxu0 0.0
  %469 = vmatpush1.msra.mxu0 %v242
  %470 = vmatprep.subr.mxu0 0.0
  %471 = vmatpush1.msra.mxu0 %v241
  %472 = vmatprep.subr.mxu0 0.0
  %473 = vmatpush1.msra.mxu0 %v240
  %474 = vmatprep.subr.mxu0 0.0
  %475 = vmatpush1.msra.mxu0 %v239
  %476 = vmatprep.subr.mxu0 0.0
  %477 = vmatpush1.msra.mxu0 %v238
  %478 = vmatprep.subr.mxu0 0.0
  %479 = vmatpush1.msra.mxu0 %v237
  %480 = vmatprep.subr.mxu0 0.0
  %481 = vmatpush1.msra.mxu0 %v236
  %482 = vmatprep.subr.mxu0 0.0
  %483 = vmatpush2.msra.mxu0 0.0
  %484 = vmatprep.subr.mxu0 0.0
  %485 = vmatpush2.msra.mxu0 0.0
  %486 = vmatprep.subr.mxu0 0.0
  %487 = vmatpush2.msra.mxu0 0.0
  %488 = vmatprep.subr.mxu0 0.0
  %489 = vmatpush2.msra.mxu0 0.0
  %490 = vmatprep.subr.mxu0 0.0
  %491 = vmatpush2.msra.mxu0 0.0
  %492 = vmatprep.subr.mxu0 0.0
  %493 = vmatpush2.msra.mxu0 0.0
  %494 = vmatprep.subr.mxu0 0.0
  %495 = vmatpush2.msra.mxu0 0.0
  %496 = vmatprep.subr.mxu0 0.0
  %497 = vmatpush2.msra.mxu0 0.0
  %498 = vmatprep.subr.mxu0 0.0
  %499 = vmatpush2.msra.mxu0 0.0
  %500 = vmatprep.subr.mxu0 0.0
  %501 = vmatpush2.msra.mxu0 0.0
  %502 = vmatprep.subr.mxu0 0.0
  %503 = vmatpush2.msra.mxu0 0.0
  %504 = vmatprep.subr.mxu0 0.0
  %505 = vmatpush2.msra.mxu0 0.0
  %506 = vmatprep.subr.mxu0 0.0
  %507 = vmatpush2.msra.mxu0 0.0
  %508 = vmatprep.subr.mxu0 0.0
  %509 = vmatpush2.msra.mxu0 0.0
  %510 = vmatprep.subr.mxu0 0.0
  %511 = vmatpush2.msra.mxu0 0.0
  %512 = vmatprep.subr.mxu0 0.0
  %513 = vmatpush2.msra.mxu0 0.0
  %514 = vmatprep.mubr.f32.mxu0 0.0
  %515 = vmatmul.mubr.f32.gmra.mxu0 %v436
  %v516 = vpop.f32.mrf.mxu0
  %v517 = vadd.f32 0.0, %v516
  %v518 = vpop.f32.mrf.mxu0
  %519 = vmatprep.mubr.f32.mxu0 0.0
  %520 = vmatmul.mubr.f32.gmra.mxu0 %v437
  %v521 = vpop.f32.mrf.mxu0
  %v522 = vadd.f32 0.0, %v521
  %v523 = vpop.f32.mrf.mxu0
  %524 = vdwg.mxu0
  %v525 = vadd.f32 %v448, %v517
  %v526 = vadd.f32 %v449, %v522
  %v527 = vtanh.pop %v525
  %v528 = vtanh.pop %v526
  %v529 = vpack.c.bf16 %v528, %v527
  %v531 = vunpack.c.l.b16 %v529
  %v532 = vunpack.c.h.b16 %v529
  %v533 = vpack.c.b16 %v531, %v531
  %v534 = vpack.c.b16 %v532, %v532
  %537 = vst [vmem:[#allocation3 + $0xc] sm:$0xf] %v533
  %538 = vst [vmem:[#allocation3 + $0x2c] sm:$0xf] %v534
  %v539 = vld [vmem:[#allocation2 + $0x40] sm:$0xff]
  %v540 = vld [vmem:[#allocation2 + $0x48] sm:$0xff]
  %541 = vmatprep.subr.mxu0 0.0
  %542 = vmatpush1.msra.mxu0 %v251
  %543 = vmatprep.subr.mxu0 0.0
  %544 = vmatpush1.msra.mxu0 %v250
  %545 = vmatprep.subr.mxu0 0.0
  %546 = vmatpush1.msra.mxu0 %v249
  %547 = vmatprep.subr.mxu0 0.0
  %548 = vmatpush1.msra.mxu0 %v248
  %549 = vmatprep.subr.mxu0 0.0
  %550 = vmatpush1.msra.mxu0 %v247
  %551 = vmatprep.subr.mxu0 0.0
  %552 = vmatpush1.msra.mxu0 %v246
  %553 = vmatprep.subr.mxu0 0.0
  %554 = vmatpush1.msra.mxu0 %v245
  %555 = vmatprep.subr.mxu0 0.0
  %556 = vmatpush1.msra.mxu0 %v244
  %557 = vmatprep.subr.mxu0 0.0
  %558 = vmatpush1.msra.mxu0 %v243
  %559 = vmatprep.subr.mxu0 0.0
  %560 = vmatpush1.msra.mxu0 %v242
  %561 = vmatprep.subr.mxu0 0.0
  %562 = vmatpush1.msra.mxu0 %v241
  %563 = vmatprep.subr.mxu0 0.0
  %564 = vmatpush1.msra.mxu0 %v240
  %565 = vmatprep.subr.mxu0 0.0
  %566 = vmatpush1.msra.mxu0 %v239
  %567 = vmatprep.subr.mxu0 0.0
  %568 = vmatpush1.msra.mxu0 %v238
  %569 = vmatprep.subr.mxu0 0.0
  %570 = vmatpush1.msra.mxu0 %v237
  %571 = vmatprep.subr.mxu0 0.0
  %572 = vmatpush1.msra.mxu0 %v236
  %573 = vmatprep.subr.mxu0 0.0
  %574 = vmatpush2.msra.mxu0 0.0
  %575 = vmatprep.subr.mxu0 0.0
  %576 = vmatpush2.msra.mxu0 0.0
  %577 = vmatprep.subr.mxu0 0.0
  %578 = vmatpush2.msra.mxu0 0.0
  %579 = vmatprep.subr.mxu0 0.0
  %580 = vmatpush2.msra.mxu0 0.0
  %581 = vmatprep.subr.mxu0 0.0
  %582 = vmatpush2.msra.mxu0 0.0
  %583 = vmatprep.subr.mxu0 0.0
  %584 = vmatpush2.msra.mxu0 0.0
  %585 = vmatprep.subr.mxu0 0.0
  %586 = vmatpush2.msra.mxu0 0.0
  %587 = vmatprep.subr.mxu0 0.0
  %588 = vmatpush2.msra.mxu0 0.0
  %589 = vmatprep.subr.mxu0 0.0
  %590 = vmatpush2.msra.mxu0 0.0
  %591 = vmatprep.subr.mxu0 0.0
  %592 = vmatpush2.msra.mxu0 0.0
  %593 = vmatprep.subr.mxu0 0.0
  %594 = vmatpush2.msra.mxu0 0.0
  %595 = vmatprep.subr.mxu0 0.0
  %596 = vmatpush2.msra.mxu0 0.0
  %597 = vmatprep.subr.mxu0 0.0
  %598 = vmatpush2.msra.mxu0 0.0
  %599 = vmatprep.subr.mxu0 0.0
  %600 = vmatpush2.msra.mxu0 0.0
  %601 = vmatprep.subr.mxu0 0.0
  %602 = vmatpush2.msra.mxu0 0.0
  %603 = vmatprep.subr.mxu0 0.0
  %604 = vmatpush2.msra.mxu0 0.0
  %605 = vmatprep.mubr.f32.mxu0 0.0
  %606 = vmatmul.mubr.f32.gmra.mxu0 %v527
  %v607 = vpop.f32.mrf.mxu0
  %v608 = vadd.f32 0.0, %v607
  %v609 = vpop.f32.mrf.mxu0
  %610 = vmatprep.mubr.f32.mxu0 0.0
  %611 = vmatmul.mubr.f32.gmra.mxu0 %v528
  %v612 = vpop.f32.mrf.mxu0
  %v613 = vadd.f32 0.0, %v612
  %v614 = vpop.f32.mrf.mxu0
  %615 = vdwg.mxu0
  %v616 = vadd.f32 %v539, %v608
  %v617 = vadd.f32 %v540, %v613
  %v618 = vtanh.pop %v616
  %v619 = vtanh.pop %v617
  %v620 = vpack.c.bf16 %v619, %v618
  %v622 = vunpack.c.l.b16 %v620
  %v623 = vunpack.c.h.b16 %v620
  %v624 = vpack.c.b16 %v622, %v622
  %v625 = vpack.c.b16 %v623, %v623
  %628 = vst [vmem:[#allocation3 + $0x10] sm:$0xf] %v624
  %629 = vst [vmem:[#allocation3 + $0x30] sm:$0xf] %v625
  %v630 = vld [vmem:[#allocation2 + $0x50] sm:$0xff]
  %v631 = vld [vmem:[#allocation2 + $0x58] sm:$0xff]
  %632 = vmatprep.subr.mxu0 0.0
  %633 = vmatpush1.msra.mxu0 %v251
  %634 = vmatprep.subr.mxu0 0.0
  %635 = vmatpush1.msra.mxu0 %v250
  %636 = vmatprep.subr.mxu0 0.0
  %637 = vmatpush1.msra.mxu0 %v249
  %638 = vmatprep.subr.mxu0 0.0
  %639 = vmatpush1.msra.mxu0 %v248
  %640 = vmatprep.subr.mxu0 0.0
  %641 = vmatpush1.msra.mxu0 %v247
  %642 = vmatprep.subr.mxu0 0.0
  %643 = vmatpush1.msra.mxu0 %v246
  %644 = vmatprep.subr.mxu0 0.0
  %645 = vmatpush1.msra.mxu0 %v245
  %646 = vmatprep.subr.mxu0 0.0
  %647 = vmatpush1.msra.mxu0 %v244
  %648 = vmatprep.subr.mxu0 0.0
  %649 = vmatpush1.msra.mxu0 %v243
  %650 = vmatprep.subr.mxu0 0.0
  %651 = vmatpush1.msra.mxu0 %v242
  %652 = vmatprep.subr.mxu0 0.0
  %653 = vmatpush1.msra.mxu0 %v241
  %654 = vmatprep.subr.mxu0 0.0
  %655 = vmatpush1.msra.mxu0 %v240
  %656 = vmatprep.subr.mxu0 0.0
  %657 = vmatpush1.msra.mxu0 %v239
  %658 = vmatprep.subr.mxu0 0.0
  %659 = vmatpush1.msra.mxu0 %v238
  %660 = vmatprep.subr.mxu0 0.0
  %661 = vmatpush1.msra.mxu0 %v237
  %662 = vmatprep.subr.mxu0 0.0
  %663 = vmatpush1.msra.mxu0 %v236
  %664 = vmatprep.subr.mxu0 0.0
  %665 = vmatpush2.msra.mxu0 0.0
  %666 = vmatprep.subr.mxu0 0.0
  %667 = vmatpush2.msra.mxu0 0.0
  %668 = vmatprep.subr.mxu0 0.0
  %669 = vmatpush2.msra.mxu0 0.0
  %670 = vmatprep.subr.mxu0 0.0
  %671 = vmatpush2.msra.mxu0 0.0
  %672 = vmatprep.subr.mxu0 0.0
  %673 = vmatpush2.msra.mxu0 0.0
  %674 = vmatprep.subr.mxu0 0.0
  %675 = vmatpush2.msra.mxu0 0.0
  %676 = vmatprep.subr.mxu0 0.0
  %677 = vmatpush2.msra.mxu0 0.0
  %678 = vmatprep.subr.mxu0 0.0
  %679 = vmatpush2.msra.mxu0 0.0
  %680 = vmatprep.subr.mxu0 0.0
  %681 = vmatpush2.msra.mxu0 0.0
  %682 = vmatprep.subr.mxu0 0.0
  %683 = vmatpush2.msra.mxu0 0.0
  %684 = vmatprep.subr.mxu0 0.0
  %685 = vmatpush2.msra.mxu0 0.0
  %686 = vmatprep.subr.mxu0 0.0
  %687 = vmatpush2.msra.mxu0 0.0
  %688 = vmatprep.subr.mxu0 0.0
  %689 = vmatpush2.msra.mxu0 0.0
  %690 = vmatprep.subr.mxu0 0.0
  %691 = vmatpush2.msra.mxu0 0.0
  %692 = vmatprep.subr.mxu0 0.0
  %693 = vmatpush2.msra.mxu0 0.0
  %694 = vmatprep.subr.mxu0 0.0
  %695 = vmatpush2.msra.mxu0 0.0
  %696 = vmatprep.mubr.f32.mxu0 0.0
  %697 = vmatmul.mubr.f32.gmra.mxu0 %v618
  %v698 = vpop.f32.mrf.mxu0
  %v699 = vadd.f32 0.0, %v698
  %v700 = vpop.f32.mrf.mxu0
  %701 = vmatprep.mubr.f32.mxu0 0.0
  %702 = vmatmul.mubr.f32.gmra.mxu0 %v619
  %v703 = vpop.f32.mrf.mxu0
  %v704 = vadd.f32 0.0, %v703
  %v705 = vpop.f32.mrf.mxu0
  %706 = vdwg.mxu0
  %v707 = vadd.f32 %v630, %v699
  %v708 = vadd.f32 %v631, %v704
  %v709 = vtanh.pop %v707
  %v710 = vtanh.pop %v708
  %v711 = vpack.c.bf16 %v710, %v709
  %v713 = vunpack.c.l.b16 %v711
  %v714 = vunpack.c.h.b16 %v711
  %v715 = vpack.c.b16 %v713, %v713
  %v716 = vpack.c.b16 %v714, %v714
  %719 = vst [vmem:[#allocation3 + $0x14] sm:$0xf] %v715
  %720 = vst [vmem:[#allocation3 + $0x34] sm:$0xf] %v716
  %v721 = vld [vmem:[#allocation2 + $0x60] sm:$0xff]
  %v722 = vld [vmem:[#allocation2 + $0x68] sm:$0xff]
  %723 = vmatprep.subr.mxu0 0.0
  %724 = vmatpush1.msra.mxu0 %v251
  %725 = vmatprep.subr.mxu0 0.0
  %726 = vmatpush1.msra.mxu0 %v250
  %727 = vmatprep.subr.mxu0 0.0
  %728 = vmatpush1.msra.mxu0 %v249
  %729 = vmatprep.subr.mxu0 0.0
  %730 = vmatpush1.msra.mxu0 %v248
  %731 = vmatprep.subr.mxu0 0.0
  %732 = vmatpush1.msra.mxu0 %v247
  %733 = vmatprep.subr.mxu0 0.0
  %734 = vmatpush1.msra.mxu0 %v246
  %735 = vmatprep.subr.mxu0 0.0
  %736 = vmatpush1.msra.mxu0 %v245
  %737 = vmatprep.subr.mxu0 0.0
  %738 = vmatpush1.msra.mxu0 %v244
  %739 = vmatprep.subr.mxu0 0.0
  %740 = vmatpush1.msra.mxu0 %v243
  %741 = vmatprep.subr.mxu0 0.0
  %742 = vmatpush1.msra.mxu0 %v242
  %743 = vmatprep.subr.mxu0 0.0
  %744 = vmatpush1.msra.mxu0 %v241
  %745 = vmatprep.subr.mxu0 0.0
  %746 = vmatpush1.msra.mxu0 %v240
  %747 = vmatprep.subr.mxu0 0.0
  %748 = vmatpush1.msra.mxu0 %v239
  %749 = vmatprep.subr.mxu0 0.0
  %750 = vmatpush1.msra.mxu0 %v238
  %751 = vmatprep.subr.mxu0 0.0
  %752 = vmatpush1.msra.mxu0 %v237
  %753 = vmatprep.subr.mxu0 0.0
  %754 = vmatpush1.msra.mxu0 %v236
  %755 = vmatprep.subr.mxu0 0.0
  %756 = vmatpush2.msra.mxu0 0.0
  %757 = vmatprep.subr.mxu0 0.0
  %758 = vmatpush2.msra.mxu0 0.0
  %759 = vmatprep.subr.mxu0 0.0
  %760 = vmatpush2.msra.mxu0 0.0
  %761 = vmatprep.subr.mxu0 0.0
  %762 = vmatpush2.msra.mxu0 0.0
  %763 = vmatprep.subr.mxu0 0.0
  %764 = vmatpush2.msra.mxu0 0.0
  %765 = vmatprep.subr.mxu0 0.0
  %766 = vmatpush2.msra.mxu0 0.0
  %767 = vmatprep.subr.mxu0 0.0
  %768 = vmatpush2.msra.mxu0 0.0
  %769 = vmatprep.subr.mxu0 0.0
  %770 = vmatpush2.msra.mxu0 0.0
  %771 = vmatprep.subr.mxu0 0.0
  %772 = vmatpush2.msra.mxu0 0.0
  %773 = vmatprep.subr.mxu0 0.0
  %774 = vmatpush2.msra.mxu0 0.0
  %775 = vmatprep.subr.mxu0 0.0
  %776 = vmatpush2.msra.mxu0 0.0
  %777 = vmatprep.subr.mxu0 0.0
  %778 = vmatpush2.msra.mxu0 0.0
  %779 = vmatprep.subr.mxu0 0.0
  %780 = vmatpush2.msra.mxu0 0.0
  %781 = vmatprep.subr.mxu0 0.0
  %782 = vmatpush2.msra.mxu0 0.0
  %783 = vmatprep.subr.mxu0 0.0
  %784 = vmatpush2.msra.mxu0 0.0
  %785 = vmatprep.subr.mxu0 0.0
  %786 = vmatpush2.msra.mxu0 0.0
  %787 = vmatprep.mubr.f32.mxu0 0.0
  %788 = vmatmul.mubr.f32.gmra.mxu0 %v709
  %v789 = vpop.f32.mrf.mxu0
  %v790 = vadd.f32 0.0, %v789
  %v791 = vpop.f32.mrf.mxu0
  %792 = vmatprep.mubr.f32.mxu0 0.0
  %793 = vmatmul.mubr.f32.gmra.mxu0 %v710
  %v794 = vpop.f32.mrf.mxu0
  %v795 = vadd.f32 0.0, %v794
  %v796 = vpop.f32.mrf.mxu0
  %797 = vdwg.mxu0
  %v798 = vadd.f32 %v721, %v790
  %v799 = vadd.f32 %v722, %v795
  %v800 = vtanh.pop %v798
  %v801 = vtanh.pop %v799
  %v802 = vpack.c.bf16 %v801, %v800
  %v804 = vunpack.c.l.b16 %v802
  %v805 = vunpack.c.h.b16 %v802
  %v806 = vpack.c.b16 %v804, %v804
  %v807 = vpack.c.b16 %v805, %v805
  %810 = vst [vmem:[#allocation3 + $0x18] sm:$0xf] %v806
  %811 = vst [vmem:[#allocation3 + $0x38] sm:$0xf] %v807
  %v812 = vld [vmem:[#allocation2 + $0x70] sm:$0xff]
  %v813 = vld [vmem:[#allocation2 + $0x78] sm:$0xff]
  %814 = vmatprep.subr.mxu0 0.0
  %815 = vmatpush1.msra.mxu0 %v251
  %816 = vmatprep.subr.mxu0 0.0
  %817 = vmatpush1.msra.mxu0 %v250
  %818 = vmatprep.subr.mxu0 0.0
  %819 = vmatpush1.msra.mxu0 %v249
  %820 = vmatprep.subr.mxu0 0.0
  %821 = vmatpush1.msra.mxu0 %v248
  %822 = vmatprep.subr.mxu0 0.0
  %823 = vmatpush1.msra.mxu0 %v247
  %824 = vmatprep.subr.mxu0 0.0
  %825 = vmatpush1.msra.mxu0 %v246
  %826 = vmatprep.subr.mxu0 0.0
  %827 = vmatpush1.msra.mxu0 %v245
  %828 = vmatprep.subr.mxu0 0.0
  %829 = vmatpush1.msra.mxu0 %v244
  %830 = vmatprep.subr.mxu0 0.0
  %831 = vmatpush1.msra.mxu0 %v243
  %832 = vmatprep.subr.mxu0 0.0
  %833 = vmatpush1.msra.mxu0 %v242
  %834 = vmatprep.subr.mxu0 0.0
  %835 = vmatpush1.msra.mxu0 %v241
  %836 = vmatprep.subr.mxu0 0.0
  %837 = vmatpush1.msra.mxu0 %v240
  %838 = vmatprep.subr.mxu0 0.0
  %839 = vmatpush1.msra.mxu0 %v239
  %840 = vmatprep.subr.mxu0 0.0
  %841 = vmatpush1.msra.mxu0 %v238
  %842 = vmatprep.subr.mxu0 0.0
  %843 = vmatpush1.msra.mxu0 %v237
  %844 = vmatprep.subr.mxu0 0.0
  %845 = vmatpush1.msra.mxu0 %v236
  %846 = vmatprep.subr.mxu0 0.0
  %847 = vmatpush2.msra.mxu0 0.0
  %848 = vmatprep.subr.mxu0 0.0
  %849 = vmatpush2.msra.mxu0 0.0
  %850 = vmatprep.subr.mxu0 0.0
  %851 = vmatpush2.msra.mxu0 0.0
  %852 = vmatprep.subr.mxu0 0.0
  %853 = vmatpush2.msra.mxu0 0.0
  %854 = vmatprep.subr.mxu0 0.0
  %855 = vmatpush2.msra.mxu0 0.0
  %856 = vmatprep.subr.mxu0 0.0
  %857 = vmatpush2.msra.mxu0 0.0
  %858 = vmatprep.subr.mxu0 0.0
  %859 = vmatpush2.msra.mxu0 0.0
  %860 = vmatprep.subr.mxu0 0.0
  %861 = vmatpush2.msra.mxu0 0.0
  %862 = vmatprep.subr.mxu0 0.0
  %863 = vmatpush2.msra.mxu0 0.0
  %864 = vmatprep.subr.mxu0 0.0
  %865 = vmatpush2.msra.mxu0 0.0
  %866 = vmatprep.subr.mxu0 0.0
  %867 = vmatpush2.msra.mxu0 0.0
  %868 = vmatprep.subr.mxu0 0.0
  %869 = vmatpush2.msra.mxu0 0.0
  %870 = vmatprep.subr.mxu0 0.0
  %871 = vmatpush2.msra.mxu0 0.0
  %872 = vmatprep.subr.mxu0 0.0
  %873 = vmatpush2.msra.mxu0 0.0
  %874 = vmatprep.subr.mxu0 0.0
  %875 = vmatpush2.msra.mxu0 0.0
  %876 = vmatprep.subr.mxu0 0.0
  %877 = vmatpush2.msra.mxu0 0.0
  %878 = vmatprep.mubr.f32.mxu0 0.0
  %879 = vmatmul.mubr.f32.gmra.mxu0 %v800
  %v880 = vpop.f32.mrf.mxu0
  %v881 = vadd.f32 0.0, %v880
  %v882 = vpop.f32.mrf.mxu0
  %883 = vmatprep.mubr.f32.mxu0 0.0
  %884 = vmatmul.mubr.f32.gmra.mxu0 %v801
  %v885 = vpop.f32.mrf.mxu0
  %v886 = vadd.f32 0.0, %v885
  %v887 = vpop.f32.mrf.mxu0
  %888 = vdwg.mxu0
  %v889 = vadd.f32 %v812, %v881
  %v890 = vadd.f32 %v813, %v886
  %v891 = vtanh.pop %v889
  %v892 = vtanh.pop %v890
  %v893 = vpack.c.bf16 %v892, %v891
  %v895 = vunpack.c.l.b16 %v893
  %v896 = vunpack.c.h.b16 %v893
  %v897 = vpack.c.b16 %v895, %v895
  %v898 = vpack.c.b16 %v896, %v896
  %901 = vst [vmem:[#allocation3 + $0x1c] sm:$0xf] %v897
  %902 = vst [vmem:[#allocation3 + $0x3c] sm:$0xf] %v898
  %v903 = vld [vmem:[#allocation3] sm:$0xff]
  %v904 = vld [vmem:[#allocation3 + $0x8] sm:$0xff]
  %v905 = vld [vmem:[#allocation3 + $0x10] sm:$0xff]
  %v906 = vld [vmem:[#allocation3 + $0x18] sm:$0xff]
  %v907 = vld [vmem:[#allocation3 + $0x20] sm:$0xff]
  %v908 = vld [vmem:[#allocation3 + $0x28] sm:$0xff]
  %v909 = vld [vmem:[#allocation3 + $0x30] sm:$0xff]
  %v910 = vld [vmem:[#allocation3 + $0x38] sm:$0xff]
  %v911 = vld [vmem:[%s4] sm:$0xf]
  %v912 = vld [vmem:[%s4 + $0x4] sm:$0xf]
  %v913 = vld [vmem:[%s4 + $0x8] sm:$0xf]
  %v914 = vld [vmem:[%s4 + $0xc] sm:$0xf]
  %v915 = vld [vmem:[%s4 + $0x10] sm:$0xf]
  %v916 = vld [vmem:[%s4 + $0x14] sm:$0xf]
  %v917 = vld [vmem:[%s4 + $0x18] sm:$0xf]
  %v918 = vld [vmem:[%s4 + $0x1c] sm:$0xf]
  %v919 = vld [vmem:[%s4 + $0x20] sm:$0xf]
  %v920 = vld [vmem:[%s4 + $0x24] sm:$0xf]
  %v921 = vld [vmem:[%s4 + $0x28] sm:$0xf]
  %v922 = vld [vmem:[%s4 + $0x2c] sm:$0xf]
  %v923 = vld [vmem:[%s4 + $0x30] sm:$0xf]
  %v924 = vld [vmem:[%s4 + $0x34] sm:$0xf]
  %v925 = vld [vmem:[%s4 + $0x38] sm:$0xf]
  %v926 = vld [vmem:[%s4 + $0x3c] sm:$0xf]
  %v927 = vld [vmem:[%s4 + $0x40] sm:$0xf]
  %v928 = vld [vmem:[%s4 + $0x44] sm:$0xf]
  %v929 = vld [vmem:[%s4 + $0x48] sm:$0xf]
  %v930 = vld [vmem:[%s4 + $0x4c] sm:$0xf]
  %v931 = vld [vmem:[%s4 + $0x50] sm:$0xf]
  %v932 = vld [vmem:[%s4 + $0x54] sm:$0xf]
  %v933 = vld [vmem:[%s4 + $0x58] sm:$0xf]
  %v934 = vld [vmem:[%s4 + $0x5c] sm:$0xf]
  %v935 = vld [vmem:[%s4 + $0x60] sm:$0xf]
  %v936 = vld [vmem:[%s4 + $0x64] sm:$0xf]
  %v937 = vld [vmem:[%s4 + $0x68] sm:$0xf]
  %v938 = vld [vmem:[%s4 + $0x6c] sm:$0xf]
  %v939 = vld [vmem:[%s4 + $0x70] sm:$0xf]
  %v940 = vld [vmem:[%s4 + $0x74] sm:$0xf]
  %v941 = vld [vmem:[%s4 + $0x78] sm:$0xf]
  %v942 = vld [vmem:[%s4 + $0x7c] sm:$0xf]
  %v943 = vld [vmem:[%s4 + $0x80] sm:$0xf]
  %v944 = vld [vmem:[%s4 + $0x84] sm:$0xf]
  %v945 = vld [vmem:[%s4 + $0x88] sm:$0xf]
  %v946 = vld [vmem:[%s4 + $0x8c] sm:$0xf]
  %v947 = vld [vmem:[%s4 + $0x90] sm:$0xf]
  %v948 = vld [vmem:[%s4 + $0x94] sm:$0xf]
  %v949 = vld [vmem:[%s4 + $0x98] sm:$0xf]
  %v950 = vld [vmem:[%s4 + $0x9c] sm:$0xf]
  %v951 = vld [vmem:[%s4 + $0xa0] sm:$0xf]
  %v952 = vld [vmem:[%s4 + $0xa4] sm:$0xf]
  %v953 = vld [vmem:[%s4 + $0xa8] sm:$0xf]
  %v954 = vld [vmem:[%s4 + $0xac] sm:$0xf]
  %v955 = vld [vmem:[%s4 + $0xb0] sm:$0xf]
  %v956 = vld [vmem:[%s4 + $0xb4] sm:$0xf]
  %v957 = vld [vmem:[%s4 + $0xb8] sm:$0xf]
  %v958 = vld [vmem:[%s4 + $0xbc] sm:$0xf]
  %v959 = vld [vmem:[%s4 + $0xc0] sm:$0xf]
  %v960 = vld [vmem:[%s4 + $0xc4] sm:$0xf]
  %v961 = vld [vmem:[%s4 + $0xc8] sm:$0xf]
  %v962 = vld [vmem:[%s4 + $0xcc] sm:$0xf]
  %v963 = vld [vmem:[%s4 + $0xd0] sm:$0xf]
  %v964 = vld [vmem:[%s4 + $0xd4] sm:$0xf]
  %v965 = vld [vmem:[%s4 + $0xd8] sm:$0xf]
  %v966 = vld [vmem:[%s4 + $0xdc] sm:$0xf]
  %v967 = vld [vmem:[%s4 + $0xe0] sm:$0xf]
  %v968 = vld [vmem:[%s4 + $0xe4] sm:$0xf]
  %v969 = vld [vmem:[%s4 + $0xe8] sm:$0xf]
  %v970 = vld [vmem:[%s4 + $0xec] sm:$0xf]
  %v971 = vld [vmem:[%s4 + $0xf0] sm:$0xf]
  %v972 = vld [vmem:[%s4 + $0xf4] sm:$0xf]
  %v973 = vld [vmem:[%s4 + $0xf8] sm:$0xf]
  %v974 = vld [vmem:[%s4 + $0xfc] sm:$0xf]
  %v975 = vld [vmem:[%s4 + $0x100] sm:$0xf]
  %v976 = vld [vmem:[%s4 + $0x104] sm:$0xf]
  %v977 = vld [vmem:[%s4 + $0x108] sm:$0xf]
  %v978 = vld [vmem:[%s4 + $0x10c] sm:$0xf]
  %v979 = vld [vmem:[%s4 + $0x110] sm:$0xf]
  %v980 = vld [vmem:[%s4 + $0x114] sm:$0xf]
  %v981 = vld [vmem:[%s4 + $0x118] sm:$0xf]
  %v982 = vld [vmem:[%s4 + $0x11c] sm:$0xf]
  %v983 = vld [vmem:[%s4 + $0x120] sm:$0xf]
  %v984 = vld [vmem:[%s4 + $0x124] sm:$0xf]
  %v985 = vld [vmem:[%s4 + $0x128] sm:$0xf]
  %v986 = vld [vmem:[%s4 + $0x12c] sm:$0xf]
  %v987 = vld [vmem:[%s4 + $0x130] sm:$0xf]
  %v988 = vld [vmem:[%s4 + $0x134] sm:$0xf]
  %v989 = vld [vmem:[%s4 + $0x138] sm:$0xf]
  %v990 = vld [vmem:[%s4 + $0x13c] sm:$0xf]
  %v991 = vld [vmem:[%s4 + $0x140] sm:$0xf]
  %v992 = vld [vmem:[%s4 + $0x144] sm:$0xf]
  %v993 = vld [vmem:[%s4 + $0x148] sm:$0xf]
  %v994 = vld [vmem:[%s4 + $0x14c] sm:$0xf]
  %v995 = vld [vmem:[%s4 + $0x150] sm:$0xf]
  %v996 = vld [vmem:[%s4 + $0x154] sm:$0xf]
  %v997 = vld [vmem:[%s4 + $0x158] sm:$0xf]
  %v998 = vld [vmem:[%s4 + $0x15c] sm:$0xf]
  %v999 = vld [vmem:[%s4 + $0x160] sm:$0xf]
  %v1000 = vld [vmem:[%s4 + $0x164] sm:$0xf]
  %v1001 = vld [vmem:[%s4 + $0x168] sm:$0xf]
  %v1002 = vld [vmem:[%s4 + $0x16c] sm:$0xf]
  %v1003 = vld [vmem:[%s4 + $0x170] sm:$0xf]
  %v1004 = vld [vmem:[%s4 + $0x174] sm:$0xf]
  %v1005 = vld [vmem:[%s4 + $0x178] sm:$0xf]
  %v1006 = vld [vmem:[%s4 + $0x17c] sm:$0xf]
  %v1007 = vld [vmem:[%s4 + $0x180] sm:$0xf]
  %v1008 = vld [vmem:[%s4 + $0x184] sm:$0xf]
  %v1009 = vld [vmem:[%s4 + $0x188] sm:$0xf]
  %v1010 = vld [vmem:[%s4 + $0x18c] sm:$0xf]
  %v1011 = vld [vmem:[%s4 + $0x190] sm:$0xf]
  %v1012 = vld [vmem:[%s4 + $0x194] sm:$0xf]
  %v1013 = vld [vmem:[%s4 + $0x198] sm:$0xf]
  %v1014 = vld [vmem:[%s4 + $0x19c] sm:$0xf]
  %v1015 = vld [vmem:[%s4 + $0x1a0] sm:$0xf]
  %v1016 = vld [vmem:[%s4 + $0x1a4] sm:$0xf]
  %v1017 = vld [vmem:[%s4 + $0x1a8] sm:$0xf]
  %v1018 = vld [vmem:[%s4 + $0x1ac] sm:$0xf]
  %v1019 = vld [vmem:[%s4 + $0x1b0] sm:$0xf]
  %v1020 = vld [vmem:[%s4 + $0x1b4] sm:$0xf]
  %v1021 = vld [vmem:[%s4 + $0x1b8] sm:$0xf]
  %v1022 = vld [vmem:[%s4 + $0x1bc] sm:$0xf]
  %v1023 = vld [vmem:[%s4 + $0x1c0] sm:$0xf]
  %v1024 = vld [vmem:[%s4 + $0x1c4] sm:$0xf]
  %v1025 = vld [vmem:[%s4 + $0x1c8] sm:$0xf]
  %v1026 = vld [vmem:[%s4 + $0x1cc] sm:$0xf]
  %v1027 = vld [vmem:[%s4 + $0x1d0] sm:$0xf]
  %v1028 = vld [vmem:[%s4 + $0x1d4] sm:$0xf]
  %v1029 = vld [vmem:[%s4 + $0x1d8] sm:$0xf]
  %v1030 = vld [vmem:[%s4 + $0x1dc] sm:$0xf]
  %v1031 = vld [vmem:[%s4 + $0x1e0] sm:$0xf]
  %v1032 = vld [vmem:[%s4 + $0x1e4] sm:$0xf]
  %v1033 = vld [vmem:[%s4 + $0x1e8] sm:$0xf]
  %v1034 = vld [vmem:[%s4 + $0x1ec] sm:$0xf]
  %v1035 = vld [vmem:[%s4 + $0x1f0] sm:$0xf]
  %v1036 = vld [vmem:[%s4 + $0x1f4] sm:$0xf]
  %v1037 = vld [vmem:[%s4 + $0x1f8] sm:$0xf]
  %v1038 = vld [vmem:[%s4 + $0x1fc] sm:$0xf]
  %v1047 = vunpack.c.l.b16 %v903
  %v1048 = vunpack.c.h.b16 %v903
  %v1049 = vunpack.c.l.b16 %v904
  %v1050 = vunpack.c.h.b16 %v904
  %v1051 = vunpack.c.l.b16 %v905
  %v1052 = vunpack.c.h.b16 %v905
  %v1053 = vunpack.c.l.b16 %v906
  %v1054 = vunpack.c.h.b16 %v906
  %v1055 = vunpack.c.l.b16 %v907
  %v1056 = vunpack.c.h.b16 %v907
  %v1057 = vunpack.c.l.b16 %v908
  %v1058 = vunpack.c.h.b16 %v908
  %v1059 = vunpack.c.l.b16 %v909
  %v1060 = vunpack.c.h.b16 %v909
  %v1061 = vunpack.c.l.b16 %v910
  %v1062 = vunpack.c.h.b16 %v910
  %v1063 = vpack.c.b16 %v1055, %v1047
  %v1064 = vpack.c.b16 %v1056, %v1048
  %v1065 = vpack.c.b16 %v1057, %v1049
  %v1066 = vpack.c.b16 %v1058, %v1050
  %v1067 = vpack.c.b16 %v1059, %v1051
  %v1068 = vpack.c.b16 %v1060, %v1052
  %v1069 = vpack.c.b16 %v1061, %v1053
  %v1070 = vpack.c.b16 %v1062, %v1054
  %v1207 = vunpack.c.l.b16 %v911
  %v1208 = vunpack.c.l.b16 %v912
  %v1209 = vunpack.c.l.b16 %v913
  %v1210 = vunpack.c.l.b16 %v914
  %v1211 = vunpack.c.l.b16 %v915
  %v1212 = vunpack.c.l.b16 %v916
  %v1213 = vunpack.c.l.b16 %v917
  %v1214 = vunpack.c.l.b16 %v918
  %v1215 = vunpack.c.l.b16 %v919
  %v1216 = vunpack.c.l.b16 %v920
  %v1217 = vunpack.c.l.b16 %v921
  %v1218 = vunpack.c.l.b16 %v922
  %v1219 = vunpack.c.l.b16 %v923
  %v1220 = vunpack.c.l.b16 %v924
  %v1221 = vunpack.c.l.b16 %v925
  %v1222 = vunpack.c.l.b16 %v926
  %v1223 = vunpack.c.l.b16 %v927
  %v1224 = vunpack.c.l.b16 %v928
  %v1225 = vunpack.c.l.b16 %v929
  %v1226 = vunpack.c.l.b16 %v930
  %v1227 = vunpack.c.l.b16 %v931
  %v1228 = vunpack.c.l.b16 %v932
  %v1229 = vunpack.c.l.b16 %v933
  %v1230 = vunpack.c.l.b16 %v934
  %v1231 = vunpack.c.l.b16 %v935
  %v1232 = vunpack.c.l.b16 %v936
  %v1233 = vunpack.c.l.b16 %v937
  %v1234 = vunpack.c.l.b16 %v938
  %v1235 = vunpack.c.l.b16 %v939
  %v1236 = vunpack.c.l.b16 %v940
  %v1237 = vunpack.c.l.b16 %v941
  %v1238 = vunpack.c.l.b16 %v942
  %v1239 = vunpack.c.l.b16 %v943
  %v1240 = vunpack.c.l.b16 %v944
  %v1241 = vunpack.c.l.b16 %v945
  %v1242 = vunpack.c.l.b16 %v946
  %v1243 = vunpack.c.l.b16 %v947
  %v1244 = vunpack.c.l.b16 %v948
  %v1245 = vunpack.c.l.b16 %v949
  %v1246 = vunpack.c.l.b16 %v950
  %v1247 = vunpack.c.l.b16 %v951
  %v1248 = vunpack.c.l.b16 %v952
  %v1249 = vunpack.c.l.b16 %v953
  %v1250 = vunpack.c.l.b16 %v954
  %v1251 = vunpack.c.l.b16 %v955
  %v1252 = vunpack.c.l.b16 %v956
  %v1253 = vunpack.c.l.b16 %v957
  %v1254 = vunpack.c.l.b16 %v958
  %v1255 = vunpack.c.l.b16 %v959
  %v1256 = vunpack.c.l.b16 %v960
  %v1257 = vunpack.c.l.b16 %v961
  %v1258 = vunpack.c.l.b16 %v962
  %v1259 = vunpack.c.l.b16 %v963
  %v1260 = vunpack.c.l.b16 %v964
  %v1261 = vunpack.c.l.b16 %v965
  %v1262 = vunpack.c.l.b16 %v966
  %v1263 = vunpack.c.l.b16 %v967
  %v1264 = vunpack.c.l.b16 %v968
  %v1265 = vunpack.c.l.b16 %v969
  %v1266 = vunpack.c.l.b16 %v970
  %v1267 = vunpack.c.l.b16 %v971
  %v1268 = vunpack.c.l.b16 %v972
  %v1269 = vunpack.c.l.b16 %v973
  %v1270 = vunpack.c.l.b16 %v974
  %v1271 = vunpack.c.l.b16 %v975
  %v1272 = vunpack.c.l.b16 %v976
  %v1273 = vunpack.c.l.b16 %v977
  %v1274 = vunpack.c.l.b16 %v978
  %v1275 = vunpack.c.l.b16 %v979
  %v1276 = vunpack.c.l.b16 %v980
  %v1277 = vunpack.c.l.b16 %v981
  %v1278 = vunpack.c.l.b16 %v982
  %v1279 = vunpack.c.l.b16 %v983
  %v1280 = vunpack.c.l.b16 %v984
  %v1281 = vunpack.c.l.b16 %v985
  %v1282 = vunpack.c.l.b16 %v986
  %v1283 = vunpack.c.l.b16 %v987
  %v1284 = vunpack.c.l.b16 %v988
  %v1285 = vunpack.c.l.b16 %v989
  %v1286 = vunpack.c.l.b16 %v990
  %v1287 = vunpack.c.l.b16 %v991
  %v1288 = vunpack.c.l.b16 %v992
  %v1289 = vunpack.c.l.b16 %v993
  %v1290 = vunpack.c.l.b16 %v994
  %v1291 = vunpack.c.l.b16 %v995
  %v1292 = vunpack.c.l.b16 %v996
  %v1293 = vunpack.c.l.b16 %v997
  %v1294 = vunpack.c.l.b16 %v998
  %v1295 = vunpack.c.l.b16 %v999
  %v1296 = vunpack.c.l.b16 %v1000
  %v1297 = vunpack.c.l.b16 %v1001
  %v1298 = vunpack.c.l.b16 %v1002
  %v1299 = vunpack.c.l.b16 %v1003
  %v1300 = vunpack.c.l.b16 %v1004
  %v1301 = vunpack.c.l.b16 %v1005
  %v1302 = vunpack.c.l.b16 %v1006
  %v1303 = vunpack.c.l.b16 %v1007
  %v1304 = vunpack.c.l.b16 %v1008
  %v1305 = vunpack.c.l.b16 %v1009
  %v1306 = vunpack.c.l.b16 %v1010
  %v1307 = vunpack.c.l.b16 %v1011
  %v1308 = vunpack.c.l.b16 %v1012
  %v1309 = vunpack.c.l.b16 %v1013
  %v1310 = vunpack.c.l.b16 %v1014
  %v1311 = vunpack.c.l.b16 %v1015
  %v1312 = vunpack.c.l.b16 %v1016
  %v1313 = vunpack.c.l.b16 %v1017
  %v1314 = vunpack.c.l.b16 %v1018
  %v1315 = vunpack.c.l.b16 %v1019
  %v1316 = vunpack.c.l.b16 %v1020
  %v1317 = vunpack.c.l.b16 %v1021
  %v1318 = vunpack.c.l.b16 %v1022
  %v1319 = vunpack.c.l.b16 %v1023
  %v1320 = vunpack.c.l.b16 %v1024
  %v1321 = vunpack.c.l.b16 %v1025
  %v1322 = vunpack.c.l.b16 %v1026
  %v1323 = vunpack.c.l.b16 %v1027
  %v1324 = vunpack.c.l.b16 %v1028
  %v1325 = vunpack.c.l.b16 %v1029
  %v1326 = vunpack.c.l.b16 %v1030
  %v1327 = vunpack.c.l.b16 %v1031
  %v1328 = vunpack.c.l.b16 %v1032
  %v1329 = vunpack.c.l.b16 %v1033
  %v1330 = vunpack.c.l.b16 %v1034
  %v1331 = vunpack.c.l.b16 %v1035
  %v1332 = vunpack.c.l.b16 %v1036
  %v1333 = vunpack.c.l.b16 %v1037
  %v1334 = vunpack.c.l.b16 %v1038
  %v1335 = vpack.c.b16 %v1208, %v1207
  %v1336 = vpack.c.b16 %v1210, %v1209
  %v1337 = vpack.c.b16 %v1212, %v1211
  %v1338 = vpack.c.b16 %v1214, %v1213
  %v1339 = vpack.c.b16 %v1216, %v1215
  %v1340 = vpack.c.b16 %v1218, %v1217
  %v1341 = vpack.c.b16 %v1220, %v1219
  %v1342 = vpack.c.b16 %v1222, %v1221
  %v1343 = vpack.c.b16 %v1224, %v1223
  %v1344 = vpack.c.b16 %v1226, %v1225
  %v1345 = vpack.c.b16 %v1228, %v1227
  %v1346 = vpack.c.b16 %v1230, %v1229
  %v1347 = vpack.c.b16 %v1232, %v1231
  %v1348 = vpack.c.b16 %v1234, %v1233
  %v1349 = vpack.c.b16 %v1236, %v1235
  %v1350 = vpack.c.b16 %v1238, %v1237
  %v1351 = vpack.c.b16 %v1240, %v1239
  %v1352 = vpack.c.b16 %v1242, %v1241
  %v1353 = vpack.c.b16 %v1244, %v1243
  %v1354 = vpack.c.b16 %v1246, %v1245
  %v1355 = vpack.c.b16 %v1248, %v1247
  %v1356 = vpack.c.b16 %v1250, %v1249
  %v1357 = vpack.c.b16 %v1252, %v1251
  %v1358 = vpack.c.b16 %v1254, %v1253
  %v1359 = vpack.c.b16 %v1256, %v1255
  %v1360 = vpack.c.b16 %v1258, %v1257
  %v1361 = vpack.c.b16 %v1260, %v1259
  %v1362 = vpack.c.b16 %v1262, %v1261
  %v1363 = vpack.c.b16 %v1264, %v1263
  %v1364 = vpack.c.b16 %v1266, %v1265
  %v1365 = vpack.c.b16 %v1268, %v1267
  %v1366 = vpack.c.b16 %v1270, %v1269
  %v1367 = vpack.c.b16 %v1272, %v1271
  %v1368 = vpack.c.b16 %v1274, %v1273
  %v1369 = vpack.c.b16 %v1276, %v1275
  %v1370 = vpack.c.b16 %v1278, %v1277
  %v1371 = vpack.c.b16 %v1280, %v1279
  %v1372 = vpack.c.b16 %v1282, %v1281
  %v1373 = vpack.c.b16 %v1284, %v1283
  %v1374 = vpack.c.b16 %v1286, %v1285
  %v1375 = vpack.c.b16 %v1288, %v1287
  %v1376 = vpack.c.b16 %v1290, %v1289
  %v1377 = vpack.c.b16 %v1292, %v1291
  %v1378 = vpack.c.b16 %v1294, %v1293
  %v1379 = vpack.c.b16 %v1296, %v1295
  %v1380 = vpack.c.b16 %v1298, %v1297
  %v1381 = vpack.c.b16 %v1300, %v1299
  %v1382 = vpack.c.b16 %v1302, %v1301
  %v1383 = vpack.c.b16 %v1304, %v1303
  %v1384 = vpack.c.b16 %v1306, %v1305
  %v1385 = vpack.c.b16 %v1308, %v1307
  %v1386 = vpack.c.b16 %v1310, %v1309
  %v1387 = vpack.c.b16 %v1312, %v1311
  %v1388 = vpack.c.b16 %v1314, %v1313
  %v1389 = vpack.c.b16 %v1316, %v1315
  %v1390 = vpack.c.b16 %v1318, %v1317
  %v1391 = vpack.c.b16 %v1320, %v1319
  %v1392 = vpack.c.b16 %v1322, %v1321
  %v1393 = vpack.c.b16 %v1324, %v1323
  %v1394 = vpack.c.b16 %v1326, %v1325
  %v1395 = vpack.c.b16 %v1328, %v1327
  %v1396 = vpack.c.b16 %v1330, %v1329
  %v1397 = vpack.c.b16 %v1332, %v1331
  %v1398 = vpack.c.b16 %v1334, %v1333
  %1463 = vmatprep.subr.bf16.mxu0 0
  %1464 = vmatpush1.bf16.msra.mxu0 %v1342
  %1465 = vmatprep.subr.bf16.mxu0 0
  %1466 = vmatpush1.bf16.msra.mxu0 %v1341
  %1467 = vmatprep.subr.bf16.mxu0 0
  %1468 = vmatpush1.bf16.msra.mxu0 %v1340
  %1469 = vmatprep.subr.bf16.mxu0 0
  %1470 = vmatpush1.bf16.msra.mxu0 %v1339
  %1471 = vmatprep.subr.bf16.mxu0 0
  %1472 = vmatpush1.bf16.msra.mxu0 %v1338
  %1473 = vmatprep.subr.bf16.mxu0 0
  %1474 = vmatpush1.bf16.msra.mxu0 %v1337
  %1475 = vmatprep.subr.bf16.mxu0 0
  %1476 = vmatpush1.bf16.msra.mxu0 %v1336
  %1477 = vmatprep.subr.bf16.mxu0 0
  %1478 = vmatpush1.bf16.msra.mxu0 %v1335
  %1479 = vmatprep.subr.bf16.mxu0 0
  %1480 = vmatpush2.bf16.msra.mxu0 %v1350
  %1481 = vmatprep.subr.bf16.mxu0 0
  %1482 = vmatpush2.bf16.msra.mxu0 %v1349
  %1483 = vmatprep.subr.bf16.mxu0 0
  %1484 = vmatpush2.bf16.msra.mxu0 %v1348
  %1485 = vmatprep.subr.bf16.mxu0 0
  %1486 = vmatpush2.bf16.msra.mxu0 %v1347
  %1487 = vmatprep.subr.bf16.mxu0 0
  %1488 = vmatpush2.bf16.msra.mxu0 %v1346
  %1489 = vmatprep.subr.bf16.mxu0 0
  %1490 = vmatpush2.bf16.msra.mxu0 %v1345
  %1491 = vmatprep.subr.bf16.mxu0 0
  %1492 = vmatpush2.bf16.msra.mxu0 %v1344
  %1493 = vmatprep.subr.bf16.mxu0 0
  %1494 = vmatpush2.bf16.msra.mxu0 %v1343
  %1495 = vmatprep.mubr.bf16.mxu0 %v1064
  %1496 = vmatmul.mubr.bf16.gmra.mxu0 %v1063
  %v1497 = vpop.f32.mrf.mxu0
  %v1498 = vadd.f32 0.0, %v1497
  %v1499 = vpop.f32.mrf.mxu0
  %v1500 = vpop.f32.mrf.mxu0
  %v1501 = vadd.f32 0.0, %v1500
  %v1502 = vpop.f32.mrf.mxu0
  %1503 = vdwg.mxu0
  %1504 = vmatprep.subr.bf16.mxu0 0
  %1505 = vmatpush1.bf16.msra.mxu0 %v1358
  %1506 = vmatprep.subr.bf16.mxu0 0
  %1507 = vmatpush1.bf16.msra.mxu0 %v1357
  %1508 = vmatprep.subr.bf16.mxu0 0
  %1509 = vmatpush1.bf16.msra.mxu0 %v1356
  %1510 = vmatprep.subr.bf16.mxu0 0
  %1511 = vmatpush1.bf16.msra.mxu0 %v1355
  %1512 = vmatprep.subr.bf16.mxu0 0
  %1513 = vmatpush1.bf16.msra.mxu0 %v1354
  %1514 = vmatprep.subr.bf16.mxu0 0
  %1515 = vmatpush1.bf16.msra.mxu0 %v1353
  %1516 = vmatprep.subr.bf16.mxu0 0
  %1517 = vmatpush1.bf16.msra.mxu0 %v1352
  %1518 = vmatprep.subr.bf16.mxu0 0
  %1519 = vmatpush1.bf16.msra.mxu0 %v1351
  %1520 = vmatprep.subr.bf16.mxu0 0
  %1521 = vmatpush2.bf16.msra.mxu0 %v1366
  %1522 = vmatprep.subr.bf16.mxu0 0
  %1523 = vmatpush2.bf16.msra.mxu0 %v1365
  %1524 = vmatprep.subr.bf16.mxu0 0
  %1525 = vmatpush2.bf16.msra.mxu0 %v1364
  %1526 = vmatprep.subr.bf16.mxu0 0
  %1527 = vmatpush2.bf16.msra.mxu0 %v1363
  %1528 = vmatprep.subr.bf16.mxu0 0
  %1529 = vmatpush2.bf16.msra.mxu0 %v1362
  %1530 = vmatprep.subr.bf16.mxu0 0
  %1531 = vmatpush2.bf16.msra.mxu0 %v1361
  %1532 = vmatprep.subr.bf16.mxu0 0
  %1533 = vmatpush2.bf16.msra.mxu0 %v1360
  %1534 = vmatprep.subr.bf16.mxu0 0
  %1535 = vmatpush2.bf16.msra.mxu0 %v1359
  %1536 = vmatprep.mubr.bf16.mxu0 %v1066
  %1537 = vmatmul.mubr.bf16.gmra.mxu0 %v1065
  %v1538 = vpop.f32.mrf.mxu0
  %v1539 = vadd.f32 %v1498, %v1538
  %v1540 = vpop.f32.mrf.mxu0
  %v1541 = vpop.f32.mrf.mxu0
  %v1542 = vadd.f32 %v1501, %v1541
  %v1543 = vpop.f32.mrf.mxu0
  %1544 = vdwg.mxu0
  %1545 = vmatprep.subr.bf16.mxu0 0
  %1546 = vmatpush1.bf16.msra.mxu0 %v1374
  %1547 = vmatprep.subr.bf16.mxu0 0
  %1548 = vmatpush1.bf16.msra.mxu0 %v1373
  %1549 = vmatprep.subr.bf16.mxu0 0
  %1550 = vmatpush1.bf16.msra.mxu0 %v1372
  %1551 = vmatprep.subr.bf16.mxu0 0
  %1552 = vmatpush1.bf16.msra.mxu0 %v1371
  %1553 = vmatprep.subr.bf16.mxu0 0
  %1554 = vmatpush1.bf16.msra.mxu0 %v1370
  %1555 = vmatprep.subr.bf16.mxu0 0
  %1556 = vmatpush1.bf16.msra.mxu0 %v1369
  %1557 = vmatprep.subr.bf16.mxu0 0
  %1558 = vmatpush1.bf16.msra.mxu0 %v1368
  %1559 = vmatprep.subr.bf16.mxu0 0
  %1560 = vmatpush1.bf16.msra.mxu0 %v1367
  %1561 = vmatprep.subr.bf16.mxu0 0
  %1562 = vmatpush2.bf16.msra.mxu0 %v1382
  %1563 = vmatprep.subr.bf16.mxu0 0
  %1564 = vmatpush2.bf16.msra.mxu0 %v1381
  %1565 = vmatprep.subr.bf16.mxu0 0
  %1566 = vmatpush2.bf16.msra.mxu0 %v1380
  %1567 = vmatprep.subr.bf16.mxu0 0
  %1568 = vmatpush2.bf16.msra.mxu0 %v1379
  %1569 = vmatprep.subr.bf16.mxu0 0
  %1570 = vmatpush2.bf16.msra.mxu0 %v1378
  %1571 = vmatprep.subr.bf16.mxu0 0
  %1572 = vmatpush2.bf16.msra.mxu0 %v1377
  %1573 = vmatprep.subr.bf16.mxu0 0
  %1574 = vmatpush2.bf16.msra.mxu0 %v1376
  %1575 = vmatprep.subr.bf16.mxu0 0
  %1576 = vmatpush2.bf16.msra.mxu0 %v1375
  %1577 = vmatprep.mubr.bf16.mxu0 %v1068
  %1578 = vmatmul.mubr.bf16.gmra.mxu0 %v1067
  %v1579 = vpop.f32.mrf.mxu0
  %v1580 = vadd.f32 %v1539, %v1579
  %v1581 = vpop.f32.mrf.mxu0
  %v1582 = vpop.f32.mrf.mxu0
  %v1583 = vadd.f32 %v1542, %v1582
  %v1584 = vpop.f32.mrf.mxu0
  %1585 = vdwg.mxu0
  %1586 = vmatprep.subr.bf16.mxu0 0
  %1587 = vmatpush1.bf16.msra.mxu0 %v1390
  %1588 = vmatprep.subr.bf16.mxu0 0
  %1589 = vmatpush1.bf16.msra.mxu0 %v1389
  %1590 = vmatprep.subr.bf16.mxu0 0
  %1591 = vmatpush1.bf16.msra.mxu0 %v1388
  %1592 = vmatprep.subr.bf16.mxu0 0
  %1593 = vmatpush1.bf16.msra.mxu0 %v1387
  %1594 = vmatprep.subr.bf16.mxu0 0
  %1595 = vmatpush1.bf16.msra.mxu0 %v1386
  %1596 = vmatprep.subr.bf16.mxu0 0
  %1597 = vmatpush1.bf16.msra.mxu0 %v1385
  %1598 = vmatprep.subr.bf16.mxu0 0
  %1599 = vmatpush1.bf16.msra.mxu0 %v1384
  %1600 = vmatprep.subr.bf16.mxu0 0
  %1601 = vmatpush1.bf16.msra.mxu0 %v1383
  %1602 = vmatprep.subr.bf16.mxu0 0
  %1603 = vmatpush2.bf16.msra.mxu0 %v1398
  %1604 = vmatprep.subr.bf16.mxu0 0
  %1605 = vmatpush2.bf16.msra.mxu0 %v1397
  %1606 = vmatprep.subr.bf16.mxu0 0
  %1607 = vmatpush2.bf16.msra.mxu0 %v1396
  %1608 = vmatprep.subr.bf16.mxu0 0
  %1609 = vmatpush2.bf16.msra.mxu0 %v1395
  %1610 = vmatprep.subr.bf16.mxu0 0
  %1611 = vmatpush2.bf16.msra.mxu0 %v1394
  %1612 = vmatprep.subr.bf16.mxu0 0
  %1613 = vmatpush2.bf16.msra.mxu0 %v1393
  %1614 = vmatprep.subr.bf16.mxu0 0
  %1615 = vmatpush2.bf16.msra.mxu0 %v1392
  %1616 = vmatprep.subr.bf16.mxu0 0
  %1617 = vmatpush2.bf16.msra.mxu0 %v1391
  %1618 = vmatprep.mubr.bf16.mxu0 %v1070
  %1619 = vmatmul.mubr.bf16.gmra.mxu0 %v1069
  %v1620 = vpop.f32.mrf.mxu0
  %v1621 = vadd.f32 %v1580, %v1620
  %v1622 = vpop.f32.mrf.mxu0
  %v1623 = vpop.f32.mrf.mxu0
  %v1624 = vadd.f32 %v1583, %v1623
  %v1625 = vpop.f32.mrf.mxu0
  %1626 = vdwg.mxu0
  %vm1627 = vcmask 64512
  %v1628 = vsel %vm1627, %v1621, -inf
  %1629 = vmax.xlane.f32.xlu0 %v1628
  %v1630 = vpop.xlane.xlu0 %1629
  %v1631 = vsel %vm1627, %v1624, -inf
  %1632 = vmax.xlane.f32.xlu0 %v1631
  %v1633 = vpop.xlane.xlu0 %1632
  %v1634 = vsub.f32 %v1621, %v1630
  %v1635 = vsub.f32 %v1624, %v1633
  %v1636 = vmul.f32 %v1634, 1.442695
  %v1637 = vpow.pop %v1636
  %v1638 = vmul.f32 %v1635, 1.442695
  %v1639 = vpow.pop %v1638
  %v1640 = vsel %vm1627, %v1637, 0.0
  %1641 = vadd.xlane.f32.xlu0 %v1640
  %v1642 = vpop.xlane.xlu0 %1641
  %v1643 = vsel %vm1627, %v1639, 0.0
  %1644 = vadd.xlane.f32.xlu0 %v1643
  %v1645 = vpop.xlane.xlu0 %1644
  %v1646 = vrcp.pop %v1642
  %v1647 = vmul.f32 %v1637, %v1646
  %v1648 = vrcp.pop %v1645
  %v1649 = vmul.f32 %v1639, %v1648
  %v1650 = vld [vmem:[#allocation3] sm:$0xf]
  %v1651 = vld [vmem:[#allocation3 + $0x20] sm:$0xf]
  %v1652 = vunpack.c.l.bf16 %v1650
  %v1653 = vunpack.c.l.bf16 %v1651
  %1655 = vset.pattern.permute.xlu0 0
  %1656 = vperm.xlu0 %1655, %v1647
  %v1657 = vpop.permute.xlu0 %1656
  %1660 = vset.pattern.permute.xlu0 0
  %1661 = vperm.xlu0 %1660, %v1649
  %v1662 = vpop.permute.xlu0 %1661
  %v1664 = vmul.f32 %v1652, %v1657
  %v1665 = vmul.f32 %v1653, %v1662
  %v1666 = vpack.c.bf16 %v1665, %v1664
  %v1668 = vunpack.c.l.b16 %v1666
  %v1669 = vunpack.c.h.b16 %v1666
  %v1670 = vpack.c.b16 %v1668, %v1668
  %v1671 = vpack.c.b16 %v1669, %v1669
  %1674 = vst [vmem:[#allocation3] sm:$0xf] %v1670
  %1675 = vst [vmem:[#allocation3 + $0x20] sm:$0xf] %v1671
  %v1676 = vld [vmem:[#allocation3 + $0x4] sm:$0xf]
  %v1677 = vld [vmem:[#allocation3 + $0x24] sm:$0xf]
  %v1678 = vunpack.c.l.bf16 %v1676
  %v1679 = vunpack.c.l.bf16 %v1677
  %1680 = vset.pattern.permute.xlu0 1
  %1681 = vperm.xlu0 %1680, %v1647
  %v1682 = vpop.permute.xlu0 %1681
  %1684 = vset.pattern.permute.xlu0 1
  %1685 = vperm.xlu0 %1684, %v1649
  %v1686 = vpop.permute.xlu0 %1685
  %v1688 = vmul.f32 %v1678, %v1682
  %v1689 = vmul.f32 %v1679, %v1686
  %v1690 = vpack.c.bf16 %v1689, %v1688
  %v1692 = vunpack.c.l.b16 %v1690
  %v1693 = vunpack.c.h.b16 %v1690
  %v1694 = vpack.c.b16 %v1692, %v1692
  %v1695 = vpack.c.b16 %v1693, %v1693
  %1698 = vst [vmem:[#allocation3 + $0x4] sm:$0xf] %v1694
  %1699 = vst [vmem:[#allocation3 + $0x24] sm:$0xf] %v1695
  %v1700 = vld [vmem:[#allocation3 + $0x8] sm:$0xf]
  %v1701 = vld [vmem:[#allocation3 + $0x28] sm:$0xf]
  %v1702 = vunpack.c.l.bf16 %v1700
  %v1703 = vunpack.c.l.bf16 %v1701
  %1704 = vset.pattern.permute.xlu0 2
  %1705 = vperm.xlu0 %1704, %v1647
  %v1706 = vpop.permute.xlu0 %1705
  %1708 = vset.pattern.permute.xlu0 2
  %1709 = vperm.xlu0 %1708, %v1649
  %v1710 = vpop.permute.xlu0 %1709
  %v1712 = vmul.f32 %v1702, %v1706
  %v1713 = vmul.f32 %v1703, %v1710
  %v1714 = vpack.c.bf16 %v1713, %v1712
  %v1716 = vunpack.c.l.b16 %v1714
  %v1717 = vunpack.c.h.b16 %v1714
  %v1718 = vpack.c.b16 %v1716, %v1716
  %v1719 = vpack.c.b16 %v1717, %v1717
  %1722 = vst [vmem:[#allocation3 + $0x8] sm:$0xf] %v1718
  %1723 = vst [vmem:[#allocation3 + $0x28] sm:$0xf] %v1719
  %v1724 = vld [vmem:[#allocation3 + $0xc] sm:$0xf]
  %v1725 = vld [vmem:[#allocation3 + $0x2c] sm:$0xf]
  %v1726 = vunpack.c.l.bf16 %v1724
  %v1727 = vunpack.c.l.bf16 %v1725
  %1728 = vset.pattern.permute.xlu0 3
  %1729 = vperm.xlu0 %1728, %v1647
  %v1730 = vpop.permute.xlu0 %1729
  %1732 = vset.pattern.permute.xlu0 3
  %1733 = vperm.xlu0 %1732, %v1649
  %v1734 = vpop.permute.xlu0 %1733
  %v1736 = vmul.f32 %v1726, %v1730
  %v1737 = vmul.f32 %v1727, %v1734
  %v1738 = vpack.c.bf16 %v1737, %v1736
  %v1740 = vunpack.c.l.b16 %v1738
  %v1741 = vunpack.c.h.b16 %v1738
  %v1742 = vpack.c.b16 %v1740, %v1740
  %v1743 = vpack.c.b16 %v1741, %v1741
  %1746 = vst [vmem:[#allocation3 + $0xc] sm:$0xf] %v1742
  %1747 = vst [vmem:[#allocation3 + $0x2c] sm:$0xf] %v1743
  %v1748 = vld [vmem:[#allocation3 + $0x10] sm:$0xf]
  %v1749 = vld [vmem:[#allocation3 + $0x30] sm:$0xf]
  %v1750 = vunpack.c.l.bf16 %v1748
  %v1751 = vunpack.c.l.bf16 %v1749
  %1752 = vset.pattern.permute.xlu0 4
  %1753 = vperm.xlu0 %1752, %v1647
  %v1754 = vpop.permute.xlu0 %1753
  %1756 = vset.pattern.permute.xlu0 4
  %1757 = vperm.xlu0 %1756, %v1649
  %v1758 = vpop.permute.xlu0 %1757
  %v1760 = vmul.f32 %v1750, %v1754
  %v1761 = vmul.f32 %v1751, %v1758
  %v1762 = vpack.c.bf16 %v1761, %v1760
  %v1764 = vunpack.c.l.b16 %v1762
  %v1765 = vunpack.c.h.b16 %v1762
  %v1766 = vpack.c.b16 %v1764, %v1764
  %v1767 = vpack.c.b16 %v1765, %v1765
  %1770 = vst [vmem:[#allocation3 + $0x10] sm:$0xf] %v1766
  %1771 = vst [vmem:[#allocation3 + $0x30] sm:$0xf] %v1767
  %v1772 = vld [vmem:[#allocation3 + $0x14] sm:$0xf]
  %v1773 = vld [vmem:[#allocation3 + $0x34] sm:$0xf]
  %v1774 = vunpack.c.l.bf16 %v1772
  %v1775 = vunpack.c.l.bf16 %v1773
  %1776 = vset.pattern.permute.xlu0 5
  %1777 = vperm.xlu0 %1776, %v1647
  %v1778 = vpop.permute.xlu0 %1777
  %1780 = vset.pattern.permute.xlu0 5
  %1781 = vperm.xlu0 %1780, %v1649
  %v1782 = vpop.permute.xlu0 %1781
  %v1784 = vmul.f32 %v1774, %v1778
  %v1785 = vmul.f32 %v1775, %v1782
  %v1786 = vpack.c.bf16 %v1785, %v1784
  %v1788 = vunpack.c.l.b16 %v1786
  %v1789 = vunpack.c.h.b16 %v1786
  %v1790 = vpack.c.b16 %v1788, %v1788
  %v1791 = vpack.c.b16 %v1789, %v1789
  %1794 = vst [vmem:[#allocation3 + $0x14] sm:$0xf] %v1790
  %1795 = vst [vmem:[#allocation3 + $0x34] sm:$0xf] %v1791
  %v1796 = vld [vmem:[#allocation3 + $0x18] sm:$0xf]
  %v1797 = vld [vmem:[#allocation3 + $0x38] sm:$0xf]
  %v1798 = vunpack.c.l.bf16 %v1796
  %v1799 = vunpack.c.l.bf16 %v1797
  %1800 = vset.pattern.permute.xlu0 6
  %1801 = vperm.xlu0 %1800, %v1647
  %v1802 = vpop.permute.xlu0 %1801
  %1804 = vset.pattern.permute.xlu0 6
  %1805 = vperm.xlu0 %1804, %v1649
  %v1806 = vpop.permute.xlu0 %1805
  %v1808 = vmul.f32 %v1798, %v1802
  %v1809 = vmul.f32 %v1799, %v1806
  %v1810 = vpack.c.bf16 %v1809, %v1808
  %v1812 = vunpack.c.l.b16 %v1810
  %v1813 = vunpack.c.h.b16 %v1810
  %v1814 = vpack.c.b16 %v1812, %v1812
  %v1815 = vpack.c.b16 %v1813, %v1813
  %1818 = vst [vmem:[#allocation3 + $0x18] sm:$0xf] %v1814
  %1819 = vst [vmem:[#allocation3 + $0x38] sm:$0xf] %v1815
  %v1820 = vld [vmem:[#allocation3 + $0x1c] sm:$0xf]
  %v1821 = vld [vmem:[#allocation3 + $0x3c] sm:$0xf]
  %v1822 = vunpack.c.l.bf16 %v1820
  %v1823 = vunpack.c.l.bf16 %v1821
  %1824 = vset.pattern.permute.xlu0 7
  %1825 = vperm.xlu0 %1824, %v1647
  %v1826 = vpop.permute.xlu0 %1825
  %1828 = vset.pattern.permute.xlu0 7
  %1829 = vperm.xlu0 %1828, %v1649
  %v1830 = vpop.permute.xlu0 %1829
  %v1832 = vmul.f32 %v1822, %v1826
  %v1833 = vmul.f32 %v1823, %v1830
  %v1834 = vpack.c.bf16 %v1833, %v1832
  %v1836 = vunpack.c.l.b16 %v1834
  %v1837 = vunpack.c.h.b16 %v1834
  %v1838 = vpack.c.b16 %v1836, %v1836
  %v1839 = vpack.c.b16 %v1837, %v1837
  %1842 = vst [vmem:[#allocation3 + $0x1c] sm:$0xf] %v1838
  %1843 = vst [vmem:[#allocation3 + $0x3c] sm:$0xf] %v1839
  %v1844 = vld [vmem:[#allocation3] sm:$0xff]
  %v1845 = vld [vmem:[#allocation3 + $0x8] sm:$0xff]
  %v1846 = vld [vmem:[#allocation3 + $0x10] sm:$0xff]
  %v1847 = vld [vmem:[#allocation3 + $0x18] sm:$0xff]
  %v1848 = vld [vmem:[#allocation3 + $0x20] sm:$0xff]
  %v1849 = vld [vmem:[#allocation3 + $0x28] sm:$0xff]
  %v1850 = vld [vmem:[#allocation3 + $0x30] sm:$0xff]
  %v1851 = vld [vmem:[#allocation3 + $0x38] sm:$0xff]
  %v1852 = vld [vmem:[%s5] sm:$0xf]
  %v1853 = vld [vmem:[%s5 + $0x4] sm:$0xf]
  %v1854 = vld [vmem:[%s5 + $0x8] sm:$0xf]
  %v1855 = vld [vmem:[%s5 + $0xc] sm:$0xf]
  %v1856 = vld [vmem:[%s5 + $0x10] sm:$0xf]
  %v1857 = vld [vmem:[%s5 + $0x14] sm:$0xf]
  %v1858 = vld [vmem:[%s5 + $0x18] sm:$0xf]
  %v1859 = vld [vmem:[%s5 + $0x1c] sm:$0xf]
  %v1860 = vld [vmem:[%s5 + $0x20] sm:$0xf]
  %v1861 = vld [vmem:[%s5 + $0x24] sm:$0xf]
  %v1862 = vld [vmem:[%s5 + $0x28] sm:$0xf]
  %v1863 = vld [vmem:[%s5 + $0x2c] sm:$0xf]
  %v1864 = vld [vmem:[%s5 + $0x30] sm:$0xf]
  %v1865 = vld [vmem:[%s5 + $0x34] sm:$0xf]
  %v1866 = vld [vmem:[%s5 + $0x38] sm:$0xf]
  %v1867 = vld [vmem:[%s5 + $0x3c] sm:$0xf]
  %v1868 = vld [vmem:[%s5 + $0x40] sm:$0xf]
  %v1869 = vld [vmem:[%s5 + $0x44] sm:$0xf]
  %v1870 = vld [vmem:[%s5 + $0x48] sm:$0xf]
  %v1871 = vld [vmem:[%s5 + $0x4c] sm:$0xf]
  %v1872 = vld [vmem:[%s5 + $0x50] sm:$0xf]
  %v1873 = vld [vmem:[%s5 + $0x54] sm:$0xf]
  %v1874 = vld [vmem:[%s5 + $0x58] sm:$0xf]
  %v1875 = vld [vmem:[%s5 + $0x5c] sm:$0xf]
  %v1876 = vld [vmem:[%s5 + $0x60] sm:$0xf]
  %v1877 = vld [vmem:[%s5 + $0x64] sm:$0xf]
  %v1878 = vld [vmem:[%s5 + $0x68] sm:$0xf]
  %v1879 = vld [vmem:[%s5 + $0x6c] sm:$0xf]
  %v1880 = vld [vmem:[%s5 + $0x70] sm:$0xf]
  %v1881 = vld [vmem:[%s5 + $0x74] sm:$0xf]
  %v1882 = vld [vmem:[%s5 + $0x78] sm:$0xf]
  %v1883 = vld [vmem:[%s5 + $0x7c] sm:$0xf]
  %v1884 = vld [vmem:[%s5 + $0x80] sm:$0xf]
  %v1885 = vld [vmem:[%s5 + $0x84] sm:$0xf]
  %v1886 = vld [vmem:[%s5 + $0x88] sm:$0xf]
  %v1887 = vld [vmem:[%s5 + $0x8c] sm:$0xf]
  %v1888 = vld [vmem:[%s5 + $0x90] sm:$0xf]
  %v1889 = vld [vmem:[%s5 + $0x94] sm:$0xf]
  %v1890 = vld [vmem:[%s5 + $0x98] sm:$0xf]
  %v1891 = vld [vmem:[%s5 + $0x9c] sm:$0xf]
  %v1892 = vld [vmem:[%s5 + $0xa0] sm:$0xf]
  %v1893 = vld [vmem:[%s5 + $0xa4] sm:$0xf]
  %v1894 = vld [vmem:[%s5 + $0xa8] sm:$0xf]
  %v1895 = vld [vmem:[%s5 + $0xac] sm:$0xf]
  %v1896 = vld [vmem:[%s5 + $0xb0] sm:$0xf]
  %v1897 = vld [vmem:[%s5 + $0xb4] sm:$0xf]
  %v1898 = vld [vmem:[%s5 + $0xb8] sm:$0xf]
  %v1899 = vld [vmem:[%s5 + $0xbc] sm:$0xf]
  %v1900 = vld [vmem:[%s5 + $0xc0] sm:$0xf]
  %v1901 = vld [vmem:[%s5 + $0xc4] sm:$0xf]
  %v1902 = vld [vmem:[%s5 + $0xc8] sm:$0xf]
  %v1903 = vld [vmem:[%s5 + $0xcc] sm:$0xf]
  %v1904 = vld [vmem:[%s5 + $0xd0] sm:$0xf]
  %v1905 = vld [vmem:[%s5 + $0xd4] sm:$0xf]
  %v1906 = vld [vmem:[%s5 + $0xd8] sm:$0xf]
  %v1907 = vld [vmem:[%s5 + $0xdc] sm:$0xf]
  %v1908 = vld [vmem:[%s5 + $0xe0] sm:$0xf]
  %v1909 = vld [vmem:[%s5 + $0xe4] sm:$0xf]
  %v1910 = vld [vmem:[%s5 + $0xe8] sm:$0xf]
  %v1911 = vld [vmem:[%s5 + $0xec] sm:$0xf]
  %v1912 = vld [vmem:[%s5 + $0xf0] sm:$0xf]
  %v1913 = vld [vmem:[%s5 + $0xf4] sm:$0xf]
  %v1914 = vld [vmem:[%s5 + $0xf8] sm:$0xf]
  %v1915 = vld [vmem:[%s5 + $0xfc] sm:$0xf]
  %v1916 = vld [vmem:[%s5 + $0x100] sm:$0xf]
  %v1917 = vld [vmem:[%s5 + $0x104] sm:$0xf]
  %v1918 = vld [vmem:[%s5 + $0x108] sm:$0xf]
  %v1919 = vld [vmem:[%s5 + $0x10c] sm:$0xf]
  %v1920 = vld [vmem:[%s5 + $0x110] sm:$0xf]
  %v1921 = vld [vmem:[%s5 + $0x114] sm:$0xf]
  %v1922 = vld [vmem:[%s5 + $0x118] sm:$0xf]
  %v1923 = vld [vmem:[%s5 + $0x11c] sm:$0xf]
  %v1924 = vld [vmem:[%s5 + $0x120] sm:$0xf]
  %v1925 = vld [vmem:[%s5 + $0x124] sm:$0xf]
  %v1926 = vld [vmem:[%s5 + $0x128] sm:$0xf]
  %v1927 = vld [vmem:[%s5 + $0x12c] sm:$0xf]
  %v1928 = vld [vmem:[%s5 + $0x130] sm:$0xf]
  %v1929 = vld [vmem:[%s5 + $0x134] sm:$0xf]
  %v1930 = vld [vmem:[%s5 + $0x138] sm:$0xf]
  %v1931 = vld [vmem:[%s5 + $0x13c] sm:$0xf]
  %v1932 = vld [vmem:[%s5 + $0x140] sm:$0xf]
  %v1933 = vld [vmem:[%s5 + $0x144] sm:$0xf]
  %v1934 = vld [vmem:[%s5 + $0x148] sm:$0xf]
  %v1935 = vld [vmem:[%s5 + $0x14c] sm:$0xf]
  %v1936 = vld [vmem:[%s5 + $0x150] sm:$0xf]
  %v1937 = vld [vmem:[%s5 + $0x154] sm:$0xf]
  %v1938 = vld [vmem:[%s5 + $0x158] sm:$0xf]
  %v1939 = vld [vmem:[%s5 + $0x15c] sm:$0xf]
  %v1940 = vld [vmem:[%s5 + $0x160] sm:$0xf]
  %v1941 = vld [vmem:[%s5 + $0x164] sm:$0xf]
  %v1942 = vld [vmem:[%s5 + $0x168] sm:$0xf]
  %v1943 = vld [vmem:[%s5 + $0x16c] sm:$0xf]
  %v1944 = vld [vmem:[%s5 + $0x170] sm:$0xf]
  %v1945 = vld [vmem:[%s5 + $0x174] sm:$0xf]
  %v1946 = vld [vmem:[%s5 + $0x178] sm:$0xf]
  %v1947 = vld [vmem:[%s5 + $0x17c] sm:$0xf]
  %v1948 = vld [vmem:[%s5 + $0x180] sm:$0xf]
  %v1949 = vld [vmem:[%s5 + $0x184] sm:$0xf]
  %v1950 = vld [vmem:[%s5 + $0x188] sm:$0xf]
  %v1951 = vld [vmem:[%s5 + $0x18c] sm:$0xf]
  %v1952 = vld [vmem:[%s5 + $0x190] sm:$0xf]
  %v1953 = vld [vmem:[%s5 + $0x194] sm:$0xf]
  %v1954 = vld [vmem:[%s5 + $0x198] sm:$0xf]
  %v1955 = vld [vmem:[%s5 + $0x19c] sm:$0xf]
  %v1956 = vld [vmem:[%s5 + $0x1a0] sm:$0xf]
  %v1957 = vld [vmem:[%s5 + $0x1a4] sm:$0xf]
  %v1958 = vld [vmem:[%s5 + $0x1a8] sm:$0xf]
  %v1959 = vld [vmem:[%s5 + $0x1ac] sm:$0xf]
  %v1960 = vld [vmem:[%s5 + $0x1b0] sm:$0xf]
  %v1961 = vld [vmem:[%s5 + $0x1b4] sm:$0xf]
  %v1962 = vld [vmem:[%s5 + $0x1b8] sm:$0xf]
  %v1963 = vld [vmem:[%s5 + $0x1bc] sm:$0xf]
  %v1964 = vld [vmem:[%s5 + $0x1c0] sm:$0xf]
  %v1965 = vld [vmem:[%s5 + $0x1c4] sm:$0xf]
  %v1966 = vld [vmem:[%s5 + $0x1c8] sm:$0xf]
  %v1967 = vld [vmem:[%s5 + $0x1cc] sm:$0xf]
  %v1968 = vld [vmem:[%s5 + $0x1d0] sm:$0xf]
  %v1969 = vld [vmem:[%s5 + $0x1d4] sm:$0xf]
  %v1970 = vld [vmem:[%s5 + $0x1d8] sm:$0xf]
  %v1971 = vld [vmem:[%s5 + $0x1dc] sm:$0xf]
  %v1972 = vld [vmem:[%s5 + $0x1e0] sm:$0xf]
  %v1973 = vld [vmem:[%s5 + $0x1e4] sm:$0xf]
  %v1974 = vld [vmem:[%s5 + $0x1e8] sm:$0xf]
  %v1975 = vld [vmem:[%s5 + $0x1ec] sm:$0xf]
  %v1976 = vld [vmem:[%s5 + $0x1f0] sm:$0xf]
  %v1977 = vld [vmem:[%s5 + $0x1f4] sm:$0xf]
  %v1978 = vld [vmem:[%s5 + $0x1f8] sm:$0xf]
  %v1979 = vld [vmem:[%s5 + $0x1fc] sm:$0xf]
  %v1980 = vld [vmem:[%s6] sm:$0x1]
  %v1982 = vlaneseq
  %v1983 = vshrl.u32 %v1982, 7
  %v1984 = vsub.s32 0, %v1983
  %v1985 = vrot.slane %v1980, %v1984
  %v1995 = vunpack.c.l.b16 %v1844
  %v1996 = vunpack.c.h.b16 %v1844
  %v1997 = vunpack.c.l.b16 %v1845
  %v1998 = vunpack.c.h.b16 %v1845
  %v1999 = vunpack.c.l.b16 %v1846
  %v2000 = vunpack.c.h.b16 %v1846
  %v2001 = vunpack.c.l.b16 %v1847
  %v2002 = vunpack.c.h.b16 %v1847
  %v2003 = vunpack.c.l.b16 %v1848
  %v2004 = vunpack.c.h.b16 %v1848
  %v2005 = vunpack.c.l.b16 %v1849
  %v2006 = vunpack.c.h.b16 %v1849
  %v2007 = vunpack.c.l.b16 %v1850
  %v2008 = vunpack.c.h.b16 %v1850
  %v2009 = vunpack.c.l.b16 %v1851
  %v2010 = vunpack.c.h.b16 %v1851
  %v2011 = vpack.c.b16 %v2003, %v1995
  %v2012 = vpack.c.b16 %v2004, %v1996
  %v2013 = vpack.c.b16 %v2005, %v1997
  %v2014 = vpack.c.b16 %v2006, %v1998
  %v2015 = vpack.c.b16 %v2007, %v1999
  %v2016 = vpack.c.b16 %v2008, %v2000
  %v2017 = vpack.c.b16 %v2009, %v2001
  %v2018 = vpack.c.b16 %v2010, %v2002
  %v2155 = vunpack.c.l.b16 %v1852
  %v2156 = vunpack.c.l.b16 %v1853
  %v2157 = vunpack.c.l.b16 %v1854
  %v2158 = vunpack.c.l.b16 %v1855
  %v2159 = vunpack.c.l.b16 %v1856
  %v2160 = vunpack.c.l.b16 %v1857
  %v2161 = vunpack.c.l.b16 %v1858
  %v2162 = vunpack.c.l.b16 %v1859
  %v2163 = vunpack.c.l.b16 %v1860
  %v2164 = vunpack.c.l.b16 %v1861
  %v2165 = vunpack.c.l.b16 %v1862
  %v2166 = vunpack.c.l.b16 %v1863
  %v2167 = vunpack.c.l.b16 %v1864
  %v2168 = vunpack.c.l.b16 %v1865
  %v2169 = vunpack.c.l.b16 %v1866
  %v2170 = vunpack.c.l.b16 %v1867
  %v2171 = vunpack.c.l.b16 %v1868
  %v2172 = vunpack.c.l.b16 %v1869
  %v2173 = vunpack.c.l.b16 %v1870
  %v2174 = vunpack.c.l.b16 %v1871
  %v2175 = vunpack.c.l.b16 %v1872
  %v2176 = vunpack.c.l.b16 %v1873
  %v2177 = vunpack.c.l.b16 %v1874
  %v2178 = vunpack.c.l.b16 %v1875
  %v2179 = vunpack.c.l.b16 %v1876
  %v2180 = vunpack.c.l.b16 %v1877
  %v2181 = vunpack.c.l.b16 %v1878
  %v2182 = vunpack.c.l.b16 %v1879
  %v2183 = vunpack.c.l.b16 %v1880
  %v2184 = vunpack.c.l.b16 %v1881
  %v2185 = vunpack.c.l.b16 %v1882
  %v2186 = vunpack.c.l.b16 %v1883
  %v2187 = vunpack.c.l.b16 %v1884
  %v2188 = vunpack.c.l.b16 %v1885
  %v2189 = vunpack.c.l.b16 %v1886
  %v2190 = vunpack.c.l.b16 %v1887
  %v2191 = vunpack.c.l.b16 %v1888
  %v2192 = vunpack.c.l.b16 %v1889
  %v2193 = vunpack.c.l.b16 %v1890
  %v2194 = vunpack.c.l.b16 %v1891
  %v2195 = vunpack.c.l.b16 %v1892
  %v2196 = vunpack.c.l.b16 %v1893
  %v2197 = vunpack.c.l.b16 %v1894
  %v2198 = vunpack.c.l.b16 %v1895
  %v2199 = vunpack.c.l.b16 %v1896
  %v2200 = vunpack.c.l.b16 %v1897
  %v2201 = vunpack.c.l.b16 %v1898
  %v2202 = vunpack.c.l.b16 %v1899
  %v2203 = vunpack.c.l.b16 %v1900
  %v2204 = vunpack.c.l.b16 %v1901
  %v2205 = vunpack.c.l.b16 %v1902
  %v2206 = vunpack.c.l.b16 %v1903
  %v2207 = vunpack.c.l.b16 %v1904
  %v2208 = vunpack.c.l.b16 %v1905
  %v2209 = vunpack.c.l.b16 %v1906
  %v2210 = vunpack.c.l.b16 %v1907
  %v2211 = vunpack.c.l.b16 %v1908
  %v2212 = vunpack.c.l.b16 %v1909
  %v2213 = vunpack.c.l.b16 %v1910
  %v2214 = vunpack.c.l.b16 %v1911
  %v2215 = vunpack.c.l.b16 %v1912
  %v2216 = vunpack.c.l.b16 %v1913
  %v2217 = vunpack.c.l.b16 %v1914
  %v2218 = vunpack.c.l.b16 %v1915
  %v2219 = vunpack.c.l.b16 %v1916
  %v2220 = vunpack.c.l.b16 %v1917
  %v2221 = vunpack.c.l.b16 %v1918
  %v2222 = vunpack.c.l.b16 %v1919
  %v2223 = vunpack.c.l.b16 %v1920
  %v2224 = vunpack.c.l.b16 %v1921
  %v2225 = vunpack.c.l.b16 %v1922
  %v2226 = vunpack.c.l.b16 %v1923
  %v2227 = vunpack.c.l.b16 %v1924
  %v2228 = vunpack.c.l.b16 %v1925
  %v2229 = vunpack.c.l.b16 %v1926
  %v2230 = vunpack.c.l.b16 %v1927
  %v2231 = vunpack.c.l.b16 %v1928
  %v2232 = vunpack.c.l.b16 %v1929
  %v2233 = vunpack.c.l.b16 %v1930
  %v2234 = vunpack.c.l.b16 %v1931
  %v2235 = vunpack.c.l.b16 %v1932
  %v2236 = vunpack.c.l.b16 %v1933
  %v2237 = vunpack.c.l.b16 %v1934
  %v2238 = vunpack.c.l.b16 %v1935
  %v2239 = vunpack.c.l.b16 %v1936
  %v2240 = vunpack.c.l.b16 %v1937
  %v2241 = vunpack.c.l.b16 %v1938
  %v2242 = vunpack.c.l.b16 %v1939
  %v2243 = vunpack.c.l.b16 %v1940
  %v2244 = vunpack.c.l.b16 %v1941
  %v2245 = vunpack.c.l.b16 %v1942
  %v2246 = vunpack.c.l.b16 %v1943
  %v2247 = vunpack.c.l.b16 %v1944
  %v2248 = vunpack.c.l.b16 %v1945
  %v2249 = vunpack.c.l.b16 %v1946
  %v2250 = vunpack.c.l.b16 %v1947
  %v2251 = vunpack.c.l.b16 %v1948
  %v2252 = vunpack.c.l.b16 %v1949
  %v2253 = vunpack.c.l.b16 %v1950
  %v2254 = vunpack.c.l.b16 %v1951
  %v2255 = vunpack.c.l.b16 %v1952
  %v2256 = vunpack.c.l.b16 %v1953
  %v2257 = vunpack.c.l.b16 %v1954
  %v2258 = vunpack.c.l.b16 %v1955
  %v2259 = vunpack.c.l.b16 %v1956
  %v2260 = vunpack.c.l.b16 %v1957
  %v2261 = vunpack.c.l.b16 %v1958
  %v2262 = vunpack.c.l.b16 %v1959
  %v2263 = vunpack.c.l.b16 %v1960
  %v2264 = vunpack.c.l.b16 %v1961
  %v2265 = vunpack.c.l.b16 %v1962
  %v2266 = vunpack.c.l.b16 %v1963
  %v2267 = vunpack.c.l.b16 %v1964
  %v2268 = vunpack.c.l.b16 %v1965
  %v2269 = vunpack.c.l.b16 %v1966
  %v2270 = vunpack.c.l.b16 %v1967
  %v2271 = vunpack.c.l.b16 %v1968
  %v2272 = vunpack.c.l.b16 %v1969
  %v2273 = vunpack.c.l.b16 %v1970
  %v2274 = vunpack.c.l.b16 %v1971
  %v2275 = vunpack.c.l.b16 %v1972
  %v2276 = vunpack.c.l.b16 %v1973
  %v2277 = vunpack.c.l.b16 %v1974
  %v2278 = vunpack.c.l.b16 %v1975
  %v2279 = vunpack.c.l.b16 %v1976
  %v2280 = vunpack.c.l.b16 %v1977
  %v2281 = vunpack.c.l.b16 %v1978
  %v2282 = vunpack.c.l.b16 %v1979
  %v2283 = vpack.c.b16 %v2156, %v2155
  %v2284 = vpack.c.b16 %v2158, %v2157
  %v2285 = vpack.c.b16 %v2160, %v2159
  %v2286 = vpack.c.b16 %v2162, %v2161
  %v2287 = vpack.c.b16 %v2164, %v2163
  %v2288 = vpack.c.b16 %v2166, %v2165
  %v2289 = vpack.c.b16 %v2168, %v2167
  %v2290 = vpack.c.b16 %v2170, %v2169
  %v2291 = vpack.c.b16 %v2172, %v2171
  %v2292 = vpack.c.b16 %v2174, %v2173
  %v2293 = vpack.c.b16 %v2176, %v2175
  %v2294 = vpack.c.b16 %v2178, %v2177
  %v2295 = vpack.c.b16 %v2180, %v2179
  %v2296 = vpack.c.b16 %v2182, %v2181
  %v2297 = vpack.c.b16 %v2184, %v2183
  %v2298 = vpack.c.b16 %v2186, %v2185
  %v2299 = vpack.c.b16 %v2188, %v2187
  %v2300 = vpack.c.b16 %v2190, %v2189
  %v2301 = vpack.c.b16 %v2192, %v2191
  %v2302 = vpack.c.b16 %v2194, %v2193
  %v2303 = vpack.c.b16 %v2196, %v2195
  %v2304 = vpack.c.b16 %v2198, %v2197
  %v2305 = vpack.c.b16 %v2200, %v2199
  %v2306 = vpack.c.b16 %v2202, %v2201
  %v2307 = vpack.c.b16 %v2204, %v2203
  %v2308 = vpack.c.b16 %v2206, %v2205
  %v2309 = vpack.c.b16 %v2208, %v2207
  %v2310 = vpack.c.b16 %v2210, %v2209
  %v2311 = vpack.c.b16 %v2212, %v2211
  %v2312 = vpack.c.b16 %v2214, %v2213
  %v2313 = vpack.c.b16 %v2216, %v2215
  %v2314 = vpack.c.b16 %v2218, %v2217
  %v2315 = vpack.c.b16 %v2220, %v2219
  %v2316 = vpack.c.b16 %v2222, %v2221
  %v2317 = vpack.c.b16 %v2224, %v2223
  %v2318 = vpack.c.b16 %v2226, %v2225
  %v2319 = vpack.c.b16 %v2228, %v2227
  %v2320 = vpack.c.b16 %v2230, %v2229
  %v2321 = vpack.c.b16 %v2232, %v2231
  %v2322 = vpack.c.b16 %v2234, %v2233
  %v2323 = vpack.c.b16 %v2236, %v2235
  %v2324 = vpack.c.b16 %v2238, %v2237
  %v2325 = vpack.c.b16 %v2240, %v2239
  %v2326 = vpack.c.b16 %v2242, %v2241
  %v2327 = vpack.c.b16 %v2244, %v2243
  %v2328 = vpack.c.b16 %v2246, %v2245
  %v2329 = vpack.c.b16 %v2248, %v2247
  %v2330 = vpack.c.b16 %v2250, %v2249
  %v2331 = vpack.c.b16 %v2252, %v2251
  %v2332 = vpack.c.b16 %v2254, %v2253
  %v2333 = vpack.c.b16 %v2256, %v2255
  %v2334 = vpack.c.b16 %v2258, %v2257
  %v2335 = vpack.c.b16 %v2260, %v2259
  %v2336 = vpack.c.b16 %v2262, %v2261
  %v2337 = vpack.c.b16 %v2264, %v2263
  %v2338 = vpack.c.b16 %v2266, %v2265
  %v2339 = vpack.c.b16 %v2268, %v2267
  %v2340 = vpack.c.b16 %v2270, %v2269
  %v2341 = vpack.c.b16 %v2272, %v2271
  %v2342 = vpack.c.b16 %v2274, %v2273
  %v2343 = vpack.c.b16 %v2276, %v2275
  %v2344 = vpack.c.b16 %v2278, %v2277
  %v2345 = vpack.c.b16 %v2280, %v2279
  %v2346 = vpack.c.b16 %v2282, %v2281
  %2411 = vmatprep.subr.bf16.mxu0 0
  %2412 = vmatpush1.bf16.msra.mxu0 %v2290
  %2413 = vmatprep.subr.bf16.mxu0 0
  %2414 = vmatpush1.bf16.msra.mxu0 %v2289
  %2415 = vmatprep.subr.bf16.mxu0 0
  %2416 = vmatpush1.bf16.msra.mxu0 %v2288
  %2417 = vmatprep.subr.bf16.mxu0 0
  %2418 = vmatpush1.bf16.msra.mxu0 %v2287
  %2419 = vmatprep.subr.bf16.mxu0 0
  %2420 = vmatpush1.bf16.msra.mxu0 %v2286
  %2421 = vmatprep.subr.bf16.mxu0 0
  %2422 = vmatpush1.bf16.msra.mxu0 %v2285
  %2423 = vmatprep.subr.bf16.mxu0 0
  %2424 = vmatpush1.bf16.msra.mxu0 %v2284
  %2425 = vmatprep.subr.bf16.mxu0 0
  %2426 = vmatpush1.bf16.msra.mxu0 %v2283
  %2427 = vmatprep.subr.bf16.mxu0 0
  %2428 = vmatpush2.bf16.msra.mxu0 %v2298
  %2429 = vmatprep.subr.bf16.mxu0 0
  %2430 = vmatpush2.bf16.msra.mxu0 %v2297
  %2431 = vmatprep.subr.bf16.mxu0 0
  %2432 = vmatpush2.bf16.msra.mxu0 %v2296
  %2433 = vmatprep.subr.bf16.mxu0 0
  %2434 = vmatpush2.bf16.msra.mxu0 %v2295
  %2435 = vmatprep.subr.bf16.mxu0 0
  %2436 = vmatpush2.bf16.msra.mxu0 %v2294
  %2437 = vmatprep.subr.bf16.mxu0 0
  %2438 = vmatpush2.bf16.msra.mxu0 %v2293
  %2439 = vmatprep.subr.bf16.mxu0 0
  %2440 = vmatpush2.bf16.msra.mxu0 %v2292
  %2441 = vmatprep.subr.bf16.mxu0 0
  %2442 = vmatpush2.bf16.msra.mxu0 %v2291
  %2443 = vmatprep.mubr.bf16.mxu0 %v2012
  %2444 = vmatmul.mubr.bf16.gmra.mxu0 %v2011
  %v2445 = vpop.f32.mrf.mxu0
  %v2446 = vadd.f32 %v1985, %v2445
  %v2447 = vpop.f32.mrf.mxu0
  %v2448 = vpop.f32.mrf.mxu0
  %v2449 = vadd.f32 %v1985, %v2448
  %v2450 = vpop.f32.mrf.mxu0
  %2451 = vdwg.mxu0
  %2452 = vmatprep.subr.bf16.mxu0 0
  %2453 = vmatpush1.bf16.msra.mxu0 %v2306
  %2454 = vmatprep.subr.bf16.mxu0 0
  %2455 = vmatpush1.bf16.msra.mxu0 %v2305
  %2456 = vmatprep.subr.bf16.mxu0 0
  %2457 = vmatpush1.bf16.msra.mxu0 %v2304
  %2458 = vmatprep.subr.bf16.mxu0 0
  %2459 = vmatpush1.bf16.msra.mxu0 %v2303
  %2460 = vmatprep.subr.bf16.mxu0 0
  %2461 = vmatpush1.bf16.msra.mxu0 %v2302
  %2462 = vmatprep.subr.bf16.mxu0 0
  %2463 = vmatpush1.bf16.msra.mxu0 %v2301
  %2464 = vmatprep.subr.bf16.mxu0 0
  %2465 = vmatpush1.bf16.msra.mxu0 %v2300
  %2466 = vmatprep.subr.bf16.mxu0 0
  %2467 = vmatpush1.bf16.msra.mxu0 %v2299
  %2468 = vmatprep.subr.bf16.mxu0 0
  %2469 = vmatpush2.bf16.msra.mxu0 %v2314
  %2470 = vmatprep.subr.bf16.mxu0 0
  %2471 = vmatpush2.bf16.msra.mxu0 %v2313
  %2472 = vmatprep.subr.bf16.mxu0 0
  %2473 = vmatpush2.bf16.msra.mxu0 %v2312
  %2474 = vmatprep.subr.bf16.mxu0 0
  %2475 = vmatpush2.bf16.msra.mxu0 %v2311
  %2476 = vmatprep.subr.bf16.mxu0 0
  %2477 = vmatpush2.bf16.msra.mxu0 %v2310
  %2478 = vmatprep.subr.bf16.mxu0 0
  %2479 = vmatpush2.bf16.msra.mxu0 %v2309
  %2480 = vmatprep.subr.bf16.mxu0 0
  %2481 = vmatpush2.bf16.msra.mxu0 %v2308
  %2482 = vmatprep.subr.bf16.mxu0 0
  %2483 = vmatpush2.bf16.msra.mxu0 %v2307
  %2484 = vmatprep.mubr.bf16.mxu0 %v2014
  %2485 = vmatmul.mubr.bf16.gmra.mxu0 %v2013
  %v2486 = vpop.f32.mrf.mxu0
  %v2487 = vadd.f32 %v2446, %v2486
  %v2488 = vpop.f32.mrf.mxu0
  %v2489 = vpop.f32.mrf.mxu0
  %v2490 = vadd.f32 %v2449, %v2489
  %v2491 = vpop.f32.mrf.mxu0
  %2492 = vdwg.mxu0
  %2493 = vmatprep.subr.bf16.mxu0 0
  %2494 = vmatpush1.bf16.msra.mxu0 %v2322
  %2495 = vmatprep.subr.bf16.mxu0 0
  %2496 = vmatpush1.bf16.msra.mxu0 %v2321
  %2497 = vmatprep.subr.bf16.mxu0 0
  %2498 = vmatpush1.bf16.msra.mxu0 %v2320
  %2499 = vmatprep.subr.bf16.mxu0 0
  %2500 = vmatpush1.bf16.msra.mxu0 %v2319
  %2501 = vmatprep.subr.bf16.mxu0 0
  %2502 = vmatpush1.bf16.msra.mxu0 %v2318
  %2503 = vmatprep.subr.bf16.mxu0 0
  %2504 = vmatpush1.bf16.msra.mxu0 %v2317
  %2505 = vmatprep.subr.bf16.mxu0 0
  %2506 = vmatpush1.bf16.msra.mxu0 %v2316
  %2507 = vmatprep.subr.bf16.mxu0 0
  %2508 = vmatpush1.bf16.msra.mxu0 %v2315
  %2509 = vmatprep.subr.bf16.mxu0 0
  %2510 = vmatpush2.bf16.msra.mxu0 %v2330
  %2511 = vmatprep.subr.bf16.mxu0 0
  %2512 = vmatpush2.bf16.msra.mxu0 %v2329
  %2513 = vmatprep.subr.bf16.mxu0 0
  %2514 = vmatpush2.bf16.msra.mxu0 %v2328
  %2515 = vmatprep.subr.bf16.mxu0 0
  %2516 = vmatpush2.bf16.msra.mxu0 %v2327
  %2517 = vmatprep.subr.bf16.mxu0 0
  %2518 = vmatpush2.bf16.msra.mxu0 %v2326
  %2519 = vmatprep.subr.bf16.mxu0 0
  %2520 = vmatpush2.bf16.msra.mxu0 %v2325
  %2521 = vmatprep.subr.bf16.mxu0 0
  %2522 = vmatpush2.bf16.msra.mxu0 %v2324
  %2523 = vmatprep.subr.bf16.mxu0 0
  %2524 = vmatpush2.bf16.msra.mxu0 %v2323
  %2525 = vmatprep.mubr.bf16.mxu0 %v2016
  %2526 = vmatmul.mubr.bf16.gmra.mxu0 %v2015
  %v2527 = vpop.f32.mrf.mxu0
  %v2528 = vadd.f32 %v2487, %v2527
  %v2529 = vpop.f32.mrf.mxu0
  %v2530 = vpop.f32.mrf.mxu0
  %v2531 = vadd.f32 %v2490, %v2530
  %v2532 = vpop.f32.mrf.mxu0
  %2533 = vdwg.mxu0
  %2534 = vmatprep.subr.bf16.mxu0 0
  %2535 = vmatpush1.bf16.msra.mxu0 %v2338
  %2536 = vmatprep.subr.bf16.mxu0 0
  %2537 = vmatpush1.bf16.msra.mxu0 %v2337
  %2538 = vmatprep.subr.bf16.mxu0 0
  %2539 = vmatpush1.bf16.msra.mxu0 %v2336
  %2540 = vmatprep.subr.bf16.mxu0 0
  %2541 = vmatpush1.bf16.msra.mxu0 %v2335
  %2542 = vmatprep.subr.bf16.mxu0 0
  %2543 = vmatpush1.bf16.msra.mxu0 %v2334
  %2544 = vmatprep.subr.bf16.mxu0 0
  %2545 = vmatpush1.bf16.msra.mxu0 %v2333
  %2546 = vmatprep.subr.bf16.mxu0 0
  %2547 = vmatpush1.bf16.msra.mxu0 %v2332
  %2548 = vmatprep.subr.bf16.mxu0 0
  %2549 = vmatpush1.bf16.msra.mxu0 %v2331
  %2550 = vmatprep.subr.bf16.mxu0 0
  %2551 = vmatpush2.bf16.msra.mxu0 %v2346
  %2552 = vmatprep.subr.bf16.mxu0 0
  %2553 = vmatpush2.bf16.msra.mxu0 %v2345
  %2554 = vmatprep.subr.bf16.mxu0 0
  %2555 = vmatpush2.bf16.msra.mxu0 %v2344
  %2556 = vmatprep.subr.bf16.mxu0 0
  %2557 = vmatpush2.bf16.msra.mxu0 %v2343
  %2558 = vmatprep.subr.bf16.mxu0 0
  %2559 = vmatpush2.bf16.msra.mxu0 %v2342
  %2560 = vmatprep.subr.bf16.mxu0 0
  %2561 = vmatpush2.bf16.msra.mxu0 %v2341
  %2562 = vmatprep.subr.bf16.mxu0 0
  %2563 = vmatpush2.bf16.msra.mxu0 %v2340
  %2564 = vmatprep.subr.bf16.mxu0 0
  %2565 = vmatpush2.bf16.msra.mxu0 %v2339
  %2566 = vmatprep.mubr.bf16.mxu0 %v2018
  %2567 = vmatmul.mubr.bf16.gmra.mxu0 %v2017
  %v2568 = vpop.f32.mrf.mxu0
  %v2569 = vadd.f32 %v2528, %v2568
  %v2570 = vpop.f32.mrf.mxu0
  %v2571 = vpop.f32.mrf.mxu0
  %v2572 = vadd.f32 %v2531, %v2571
  %v2573 = vpop.f32.mrf.mxu0
  %2574 = vdwg.mxu0
  %2575 = vst.msk [vmem:[%s7] sm:$0xff] %vm1627, %v2569
  %2576 = vst.msk [vmem:[%s7 + $0x8] sm:$0xff] %vm1627, %v2572
  // Predicated region
  $region30: #{tpu_custom_call.1} parent=0 // pred_check
    _
  $region31: #{tpu_custom_call.1} parent=0 // pred_check_branch
    %2578 = sbr.rel (0) target = $region33
  $region32: #{tpu_custom_call.1} parent=0 // pred_region
    _
  $region33: #{tpu_custom_call.1} parent=0 // pred_fallthru
    _
  // Predicated region
  $region34: #{tpu_custom_call.1} parent=0 // pred_check
    _
  $region35: #{tpu_custom_call.1} parent=0 // pred_check_branch
    %2580 = sbr.rel (0) target = $region37
  $region36: #{tpu_custom_call.1} parent=0 // pred_region
    _
  $region37: #{tpu_custom_call.1} parent=0 // pred_fallthru
    _

</llo_original>
